<compile_context>
chip_gen: v6e
topology: v6e:2x2x1
jax: 0.10.0
libtpu: 0.0.40
codegen_flags: <defaults>
</compile_context>

<pallas_src>
import functools

import numpy as np

import jax
import jax.numpy as jnp
from jax.experimental import pallas as pl
from jax.experimental.pallas import tpu as pltpu


# ----------------------------- fused kernel -------------------------------------

def _fused_kernel(x_ref, w_in_ref, b_in_ref, w_big_ref, b_big_ref, mask_ref,
                  o_ref, rpad_ref, p_ref, *, H, W, cm, S):
    """One batch element per grid step.

    x_ref    : (Cin, H*W)        input, spatial flattened on lanes
    w_in_ref : (4cm, Cin)        fused 1x1 weights  [w1; w2a; w3a; w4a]
    b_in_ref : (4cm, 1)          fused 1x1 biases
    w_big_ref: (Cout, 28cm)      merged (3x3-branch weights) @ (conv_cat weights)
    b_big_ref: (Cout, 1)         merged bias (3x3 biases folded through conv_cat)
    mask_ref : (27, H*W)         per-(dilation, tap) validity mask ('same' pad)
    o_ref    : (Cout, H*W)       output, NCHW-native, lane-dense
    rpad_ref : (4cm, H*W + 2S)   VMEM scratch: zero-padded flat activation
    p_ref    : (28cm, H*W)       VMEM scratch: im2col matrix
    """
    HW = H * W

    # -- stage 1: fused four 1x1 convs + ReLU (lane-dense N = H*W) ----------------
    r = jnp.dot(w_in_ref[...], x_ref[...], preferred_element_type=jnp.float32)
    r = jnp.maximum(r + b_in_ref[...], 0.0)

    # -- stage 2: zero-padded flat copy in VMEM -----------------------------------
    # A shift of dh*W + dw on the flattened spatial axis is then just a lane-slice;
    # zero pads + the static masks reproduce the 'same' padding of the 3x3 convs.
    rpad_ref[...] = jnp.zeros_like(rpad_ref)
    rpad_ref[:, S:S + HW] = r

    # -- stage 3: build the (28cm, H*W) im2col in VMEM ----------------------------
    # rows [0:cm]               : branch-1 activation (identity, no spatial tap)
    # rows [cm + (b*9+t)*cm ...]: dilated branch b (d = b+1), tap t, cm channels
    p_ref[0:cm, :] = rpad_ref[0:cm, S:S + HW]
    row = cm
    for b_idx, d in enumerate((1, 2, 3)):
        c0 = (b_idx + 1) * cm
        for kh in range(3):
            for kw in range(3):
                shift = (kh - 1) * d * W + (kw - 1) * d
                t = b_idx * 9 + kh * 3 + kw
                win = rpad_ref[c0:c0 + cm, S + shift:S + shift + HW]
                p_ref[row:row + cm, :] = win * mask_ref[t:t + 1, :]
                row += cm

    # -- stage 4: ONE MXU matmul = 3 dilated convs + concat + final 1x1 conv ------
    acc = jnp.dot(w_big_ref[...], p_ref[...], preferred_element_type=jnp.float32)
    o_ref[...] = (acc + b_big_ref[...]).astype(o_ref.dtype)


def _tap_masks(H, W):
    """Static (27, H*W) 0/1 masks: validity of each (dilation, tap) source pixel."""
    m = np.zeros((27, H * W), np.float32)
    hh, ww = np.meshgrid(np.arange(H), np.arange(W), indexing="ij")
    t = 0
    for d in (1, 2, 3):
        for kh in range(3):
            for kw in range(3):
                dh, dw = (kh - 1) * d, (kw - 1) * d
                valid = ((hh + dh >= 0) & (hh + dh < H) &
                         (ww + dw >= 0) & (ww + dw < W))
                m[t] = valid.reshape(-1)
                t += 1
    return jnp.asarray(m)


# ----------------------------- module: params + forward -------------------------

def init_params(key, in_channels, out_channels, dtype=jnp.float32):
    """Deterministic init mimicking PyTorch Conv2d defaults (uniform +/-1/sqrt(fan_in))."""
    cm = out_channels // 4
    keys = iter(jax.random.split(key, 16))

    def conv_init(cin, cout, kh, kw):
        bound = 1.0 / float(cin * kh * kw) ** 0.5
        w = jax.random.uniform(next(keys), (kh, kw, cin, cout), dtype, -bound, bound)
        b = jax.random.uniform(next(keys), (cout,), dtype, -bound, bound)
        return w, b

    p = {}
    w, b = conv_init(in_channels, cm, 1, 1); p["w1"], p["bb1"] = w[0, 0], b
    w, b = conv_init(in_channels, cm, 1, 1); p["w2a"], p["b2a"] = w[0, 0], b
    w, b = conv_init(cm, cm, 3, 3);          p["w2b"], p["b2b"] = w, b
    w, b = conv_init(in_channels, cm, 1, 1); p["w3a"], p["b3a"] = w[0, 0], b
    w, b = conv_init(cm, cm, 3, 3);          p["w3b"], p["b3b"] = w, b
    w, b = conv_init(in_channels, cm, 1, 1); p["w4a"], p["b4a"] = w[0, 0], b
    w, b = conv_init(cm, cm, 3, 3);          p["w4b"], p["b4b"] = w, b
    w, b = conv_init(out_channels, out_channels, 1, 1); p["wc"], p["bc"] = w[0, 0], b
    return p


def dilated_inception_forward(params, x_nchw):
    """x_nchw: (B, Cin, H, W) -> (B, Cout, H, W).  Single fused Pallas kernel."""
    B, Cin, H, W = x_nchw.shape
    cm = params["w1"].shape[1]
    C4 = 4 * cm                      # == out_channels
    HW = H * W
    S = 3 * W + 3                    # max |flat shift| for dilation <= 3
    L = HW + 2 * S
    KC = 28 * cm                     # im2col depth: cm (branch1) + 3 * 9 taps * cm

    # ---- tiny once-per-call weight prep (O(C^2), no activation traffic) --------
    # Fused input 1x1 weights/biases, channel order [b1 | r2 | r3 | r4].
    w_in = jnp.concatenate([params["w1"].T, params["w2a"].T,
                            params["w3a"].T, params["w4a"].T], axis=0)     # (C4, Cin)
    b_in = jnp.concatenate([params["bb1"], params["b2a"],
                            params["b3a"], params["b4a"]])                 # (C4,)
    # conv_cat is linear -> fold it through each branch:
    #   out = wc^T @ concat(b1..b4) + bc
    #       = wc^T[:, :cm] @ b1 + sum_k (wc^T_k @ W_k) @ P_k + (bc + sum_k wc^T_k @ bias_k)
    wcT = params["wc"].T                                                   # (C4, C4)
    cols = [wcT[:, 0:cm]]
    b_big = params["bc"]
    for k, (wname, bname) in enumerate((("w2b", "b2b"), ("w3b", "b3b"),
                                        ("w4b", "b4b")), start=1):
        wk = params[wname].reshape(9 * cm, cm)         # rows = tap*cm + ci, cols = co
        wcTk = wcT[:, k * cm:(k + 1) * cm]             # (C4, cm)
        cols.append(wcTk @ wk.T)                       # (C4, 9*cm)
        b_big = b_big + wcTk @ params[bname]
    w_big = jnp.concatenate(cols, axis=1)              # (C4, KC)

    masks = _tap_masks(H, W)                           # (27, HW) static constant
    x_flat = x_nchw.reshape(B, Cin, HW)                # free reshape, NCHW-native

    out = pl.pallas_call(
        functools.partial(_fused_kernel, H=H, W=W, cm=cm, S=S),
        out_shape=jax.ShapeDtypeStruct((B, C4, HW), x_nchw.dtype),
        grid_spec=pltpu.PrefetchScalarGridSpec(
            num_scalar_prefetch=0,
            grid=(B,),
            in_specs=[
                pl.BlockSpec((pl.Squeezed(), Cin, HW), lambda b: (b, 0, 0)),  # x
                pl.BlockSpec((C4, Cin), lambda b: (0, 0)),                    # w_in
                pl.BlockSpec((C4, 1), lambda b: (0, 0)),                      # b_in
                pl.BlockSpec((C4, KC), lambda b: (0, 0)),                     # w_big
                pl.BlockSpec((C4, 1), lambda b: (0, 0)),                      # b_big
                pl.BlockSpec((27, HW), lambda b: (0, 0)),                     # masks
            ],
            out_specs=pl.BlockSpec((pl.Squeezed(), C4, HW), lambda b: (b, 0, 0)),
            scratch_shapes=[pltpu.VMEM((C4, L), jnp.float32),
                            pltpu.VMEM((KC, HW), jnp.float32)]),
        compiler_params=pltpu.CompilerParams(
            dimension_semantics=("parallel",)),        # B images -> 2 TCs on v7x
    )(x_flat, w_in, b_in.reshape(C4, 1), w_big, b_big.reshape(C4, 1), masks)

    return out.reshape(B, C4, H, W)                    # free reshape, already NCHW


# ----------------------------- pure-JAX reference -------------------------------

def ref_forward(params, x):
    def conv(xx, w_hwio, b, dil=1, pad=0):
        y = jax.lax.conv_general_dilated(
            xx, w_hwio, (1, 1), ((pad, pad), (pad, pad)),
            rhs_dilation=(dil, dil),
            dimension_numbers=("NCHW", "HWIO", "NCHW"))
        return y + b.reshape(1, -1, 1, 1)

    def pw(w2d):
        return w2d.reshape(1, 1, *w2d.shape)

    b1 = jax.nn.relu(conv(x, pw(params["w1"]), params["bb1"]))
    r2 = jax.nn.relu(conv(x, pw(params["w2a"]), params["b2a"]))
    b2 = conv(r2, params["w2b"], params["b2b"], dil=1, pad=1)
    r3 = jax.nn.relu(conv(x, pw(params["w3a"]), params["b3a"]))
    b3 = conv(r3, params["w3b"], params["b3b"], dil=2, pad=2)
    r4 = jax.nn.relu(conv(x, pw(params["w4a"]), params["b4a"]))
    b4 = conv(r4, params["w4b"], params["b4b"], dil=3, pad=3)
    cat = jnp.concatenate([b1, b2, b3, b4], axis=1)
    return conv(cat, pw(params["wc"]), params["bc"])


if __name__ == "__main__":
    key = jax.random.PRNGKey(0)
    in_channels, out_channels = 4, 8
    B, H, W = 2, 16, 16

    kp, kx = jax.random.split(key)
    params = init_params(kp, in_channels, out_channels)
    x = jax.random.normal(kx, (B, in_channels, H, W), jnp.float32)

    fwd = jax.jit(dilated_inception_forward)
    out = fwd(params, x)
    out = jax.block_until_ready(out)

    assert out.shape == (B, out_channels, H, W), out.shape
    ref = ref_forward(params, x)
    max_err = float(jnp.max(jnp.abs(out - ref)))
    assert jnp.allclose(out, ref, atol=2e-2, rtol=2e-2), f"max_err={max_err}"

    print("KERNEL_OK")
</pallas_src>

<mosaic_0001>
module attributes {stable_mosaic.version = 11 : i64} {
  func.func @_fused_kernel(%arg0: i32, %arg1: memref<1x4x256xf32, #tpu.memory_space<vmem>>, %arg2: memref<8x4xf32, #tpu.memory_space<vmem>>, %arg3: memref<8x1xf32, #tpu.memory_space<vmem>>, %arg4: memref<8x56xf32, #tpu.memory_space<vmem>>, %arg5: memref<8x1xf32, #tpu.memory_space<vmem>>, %arg6: memref<27x256xf32, #tpu.memory_space<vmem>>, %arg7: memref<1x8x256xf32, #tpu.memory_space<vmem>>, %arg8: memref<8x358xf32, #tpu.memory_space<vmem>>, %arg9: memref<56x256xf32, #tpu.memory_space<vmem>>) attributes {dimension_semantics = [#tpu.dimension_semantics<parallel>], iteration_bounds = array<i64: 2>, scalar_prefetch = 0 : i64, scratch_operands = 2 : i64, tpu.core_type = #tpu.core_type<tc>, window_params = [{transform_indices = @transform_0, window_bounds = array<i64: 1, 4, 256>}, {pipeline_mode = #tpu.pipeline_mode<synchronous>, transform_indices = @transform_1, window_bounds = array<i64: 8, 4>}, {pipeline_mode = #tpu.pipeline_mode<synchronous>, transform_indices = @transform_2, window_bounds = array<i64: 8, 1>}, {pipeline_mode = #tpu.pipeline_mode<synchronous>, transform_indices = @transform_3, window_bounds = array<i64: 8, 56>}, {pipeline_mode = #tpu.pipeline_mode<synchronous>, transform_indices = @transform_4, window_bounds = array<i64: 8, 1>}, {pipeline_mode = #tpu.pipeline_mode<synchronous>, transform_indices = @transform_5, window_bounds = array<i64: 27, 256>}, {transform_indices = @transform_6, window_bounds = array<i64: 1, 8, 256>}]} {
    %c0 = arith.constant 0 : index
    %c0_0 = arith.constant 0 : index
    %0 = vector.load %arg2[%c0, %c0_0] : memref<8x4xf32, #tpu.memory_space<vmem>>, vector<8x4xf32>
    %c0_1 = arith.constant 0 : index
    %c0_2 = arith.constant 0 : index
    %c0_3 = arith.constant 0 : index
    %1 = vector.load %arg1[%c0_1, %c0_2, %c0_3] : memref<1x4x256xf32, #tpu.memory_space<vmem>>, vector<1x4x256xf32>
    %2 = vector.shape_cast %1 : vector<1x4x256xf32> to vector<4x256xf32>
    %cst = arith.constant dense<0.000000e+00> : vector<8x256xf32>
    %3 = tpu.matmul %0, %2, %cst {dimension_numbers = #tpu.dot_dimension_numbers<[1], [0], [0], [1], [0, 0, 1, 1], [], []>} : vector<8x4xf32>, vector<4x256xf32>, vector<8x256xf32> -> vector<8x256xf32>
    %c0_4 = arith.constant 0 : index
    %c0_5 = arith.constant 0 : index
    %4 = vector.load %arg3[%c0_4, %c0_5] : memref<8x1xf32, #tpu.memory_space<vmem>>, vector<8x1xf32>
    %5 = vector.broadcast %4 : vector<8x1xf32> to vector<8x256xf32>
    %6 = arith.addf %3, %5 : vector<8x256xf32>
    %cst_6 = arith.constant 0.000000e+00 : f32
    %7 = vector.broadcast %cst_6 : f32 to vector<8x256xf32>
    %8 = arith.maximumf %6, %7 : vector<8x256xf32>
    %cst_7 = arith.constant 0.000000e+00 : f32
    %9 = vector.broadcast %cst_7 : f32 to vector<8x358xf32>
    %c0_8 = arith.constant 0 : index
    %c0_9 = arith.constant 0 : index
    %10 = vector.load %arg8[%c0_8, %c0_9] : memref<8x358xf32, #tpu.memory_space<vmem>>, vector<8x358xf32>
    tpu.vector_store %arg8[%c0_8, %c0_9], %9 {strides = array<i32>} : memref<8x358xf32, #tpu.memory_space<vmem>>, vector<8x358xf32>,
    %c0_10 = arith.constant 0 : index
    %c51 = arith.constant 51 : index
    %11 = vector.load %arg8[%c0_10, %c51] : memref<8x358xf32, #tpu.memory_space<vmem>>, vector<8x256xf32>
    tpu.vector_store %arg8[%c0_10, %c51], %8 {strides = array<i32>} : memref<8x358xf32, #tpu.memory_space<vmem>>, vector<8x256xf32>,
    %c0_11 = arith.constant 0 : index
    %c51_12 = arith.constant 51 : index
    %12 = vector.load %arg8[%c0_11, %c51_12] : memref<8x358xf32, #tpu.memory_space<vmem>>, vector<2x256xf32>
    %c0_13 = arith.constant 0 : index
    %c0_14 = arith.constant 0 : index
    %13 = vector.load %arg9[%c0_13, %c0_14] : memref<56x256xf32, #tpu.memory_space<vmem>>, vector<2x256xf32>
    tpu.vector_store %arg9[%c0_13, %c0_14], %12 {strides = array<i32>} : memref<56x256xf32, #tpu.memory_space<vmem>>, vector<2x256xf32>,
    %c2 = arith.constant 2 : index
    %c34 = arith.constant 34 : index
    %14 = vector.load %arg8[%c2, %c34] : memref<8x358xf32, #tpu.memory_space<vmem>>, vector<2x256xf32>
    %c0_15 = arith.constant 0 : index
    %c0_16 = arith.constant 0 : index
    %15 = vector.load %arg6[%c0_15, %c0_16] : memref<27x256xf32, #tpu.memory_space<vmem>>, vector<1x256xf32>
    %16 = vector.broadcast %15 : vector<1x256xf32> to vector<2x256xf32>
    %17 = arith.mulf %14, %16 : vector<2x256xf32>
    %c2_17 = arith.constant 2 : index
    %c0_18 = arith.constant 0 : index
    %18 = vector.load %arg9[%c2_17, %c0_18] : memref<56x256xf32, #tpu.memory_space<vmem>>, vector<2x256xf32>
    tpu.vector_store %arg9[%c2_17, %c0_18], %17 {strides = array<i32>} : memref<56x256xf32, #tpu.memory_space<vmem>>, vector<2x256xf32>,
    %c2_19 = arith.constant 2 : index
    %c35 = arith.constant 35 : index
    %19 = vector.load %arg8[%c2_19, %c35] : memref<8x358xf32, #tpu.memory_space<vmem>>, vector<2x256xf32>
    %c1 = arith.constant 1 : index
    %c0_20 = arith.constant 0 : index
    %20 = vector.load %arg6[%c1, %c0_20] : memref<27x256xf32, #tpu.memory_space<vmem>>, vector<1x256xf32>
    %21 = vector.broadcast %20 : vector<1x256xf32> to vector<2x256xf32>
    %22 = arith.mulf %19, %21 : vector<2x256xf32>
    %c4 = arith.constant 4 : index
    %c0_21 = arith.constant 0 : index
    %23 = vector.load %arg9[%c4, %c0_21] : memref<56x256xf32, #tpu.memory_space<vmem>>, vector<2x256xf32>
    tpu.vector_store %arg9[%c4, %c0_21], %22 {strides = array<i32>} : memref<56x256xf32, #tpu.memory_space<vmem>>, vector<2x256xf32>,
    %c2_22 = arith.constant 2 : index
    %c36 = arith.constant 36 : index
    %24 = vector.load %arg8[%c2_22, %c36] : memref<8x358xf32, #tpu.memory_space<vmem>>, vector<2x256xf32>
    %c2_23 = arith.constant 2 : index
    %c0_24 = arith.constant 0 : index
    %25 = vector.load %arg6[%c2_23, %c0_24] : memref<27x256xf32, #tpu.memory_space<vmem>>, vector<1x256xf32>
    %26 = vector.broadcast %25 : vector<1x256xf32> to vector<2x256xf32>
    %27 = arith.mulf %24, %26 : vector<2x256xf32>
    %c6 = arith.constant 6 : index
    %c0_25 = arith.constant 0 : index
    %28 = vector.load %arg9[%c6, %c0_25] : memref<56x256xf32, #tpu.memory_space<vmem>>, vector<2x256xf32>
    tpu.vector_store %arg9[%c6, %c0_25], %27 {strides = array<i32>} : memref<56x256xf32, #tpu.memory_space<vmem>>, vector<2x256xf32>,
    %c2_26 = arith.constant 2 : index
    %c50 = arith.constant 50 : index
    %29 = vector.load %arg8[%c2_26, %c50] : memref<8x358xf32, #tpu.memory_space<vmem>>, vector<2x256xf32>
    %c3 = arith.constant 3 : index
    %c0_27 = arith.constant 0 : index
    %30 = vector.load %arg6[%c3, %c0_27] : memref<27x256xf32, #tpu.memory_space<vmem>>, vector<1x256xf32>
    %31 = vector.broadcast %30 : vector<1x256xf32> to vector<2x256xf32>
    %32 = arith.mulf %29, %31 : vector<2x256xf32>
    %c8 = arith.constant 8 : index
    %c0_28 = arith.constant 0 : index
    %33 = vector.load %arg9[%c8, %c0_28] : memref<56x256xf32, #tpu.memory_space<vmem>>, vector<2x256xf32>
    tpu.vector_store %arg9[%c8, %c0_28], %32 {strides = array<i32>} : memref<56x256xf32, #tpu.memory_space<vmem>>, vector<2x256xf32>,
    %c2_29 = arith.constant 2 : index
    %c51_30 = arith.constant 51 : index
    %34 = vector.load %arg8[%c2_29, %c51_30] : memref<8x358xf32, #tpu.memory_space<vmem>>, vector<2x256xf32>
    %c4_31 = arith.constant 4 : index
    %c0_32 = arith.constant 0 : index
    %35 = vector.load %arg6[%c4_31, %c0_32] : memref<27x256xf32, #tpu.memory_space<vmem>>, vector<1x256xf32>
    %36 = vector.broadcast %35 : vector<1x256xf32> to vector<2x256xf32>
    %37 = arith.mulf %34, %36 : vector<2x256xf32>
    %c10 = arith.constant 10 : index
    %c0_33 = arith.constant 0 : index
    %38 = vector.load %arg9[%c10, %c0_33] : memref<56x256xf32, #tpu.memory_space<vmem>>, vector<2x256xf32>
    tpu.vector_store %arg9[%c10, %c0_33], %37 {strides = array<i32>} : memref<56x256xf32, #tpu.memory_space<vmem>>, vector<2x256xf32>,
    %c2_34 = arith.constant 2 : index
    %c52 = arith.constant 52 : index
    %39 = vector.load %arg8[%c2_34, %c52] : memref<8x358xf32, #tpu.memory_space<vmem>>, vector<2x256xf32>
    %c5 = arith.constant 5 : index
    %c0_35 = arith.constant 0 : index
    %40 = vector.load %arg6[%c5, %c0_35] : memref<27x256xf32, #tpu.memory_space<vmem>>, vector<1x256xf32>
    %41 = vector.broadcast %40 : vector<1x256xf32> to vector<2x256xf32>
    %42 = arith.mulf %39, %41 : vector<2x256xf32>
    %c12 = arith.constant 12 : index
    %c0_36 = arith.constant 0 : index
    %43 = vector.load %arg9[%c12, %c0_36] : memref<56x256xf32, #tpu.memory_space<vmem>>, vector<2x256xf32>
    tpu.vector_store %arg9[%c12, %c0_36], %42 {strides = array<i32>} : memref<56x256xf32, #tpu.memory_space<vmem>>, vector<2x256xf32>,
    %c2_37 = arith.constant 2 : index
    %c66 = arith.constant 66 : index
    %44 = vector.load %arg8[%c2_37, %c66] : memref<8x358xf32, #tpu.memory_space<vmem>>, vector<2x256xf32>
    %c6_38 = arith.constant 6 : index
    %c0_39 = arith.constant 0 : index
    %45 = vector.load %arg6[%c6_38, %c0_39] : memref<27x256xf32, #tpu.memory_space<vmem>>, vector<1x256xf32>
    %46 = vector.broadcast %45 : vector<1x256xf32> to vector<2x256xf32>
    %47 = arith.mulf %44, %46 : vector<2x256xf32>
    %c14 = arith.constant 14 : index
    %c0_40 = arith.constant 0 : index
    %48 = vector.load %arg9[%c14, %c0_40] : memref<56x256xf32, #tpu.memory_space<vmem>>, vector<2x256xf32>
    tpu.vector_store %arg9[%c14, %c0_40], %47 {strides = array<i32>} : memref<56x256xf32, #tpu.memory_space<vmem>>, vector<2x256xf32>,
    %c2_41 = arith.constant 2 : index
    %c67 = arith.constant 67 : index
    %49 = vector.load %arg8[%c2_41, %c67] : memref<8x358xf32, #tpu.memory_space<vmem>>, vector<2x256xf32>
    %c7 = arith.constant 7 : index
    %c0_42 = arith.constant 0 : index
    %50 = vector.load %arg6[%c7, %c0_42] : memref<27x256xf32, #tpu.memory_space<vmem>>, vector<1x256xf32>
    %51 = vector.broadcast %50 : vector<1x256xf32> to vector<2x256xf32>
    %52 = arith.mulf %49, %51 : vector<2x256xf32>
    %c16 = arith.constant 16 : index
    %c0_43 = arith.constant 0 : index
    %53 = vector.load %arg9[%c16, %c0_43] : memref<56x256xf32, #tpu.memory_space<vmem>>, vector<2x256xf32>
    tpu.vector_store %arg9[%c16, %c0_43], %52 {strides = array<i32>} : memref<56x256xf32, #tpu.memory_space<vmem>>, vector<2x256xf32>,
    %c2_44 = arith.constant 2 : index
    %c68 = arith.constant 68 : index
    %54 = vector.load %arg8[%c2_44, %c68] : memref<8x358xf32, #tpu.memory_space<vmem>>, vector<2x256xf32>
    %c8_45 = arith.constant 8 : index
    %c0_46 = arith.constant 0 : index
    %55 = vector.load %arg6[%c8_45, %c0_46] : memref<27x256xf32, #tpu.memory_space<vmem>>, vector<1x256xf32>
    %56 = vector.broadcast %55 : vector<1x256xf32> to vector<2x256xf32>
    %57 = arith.mulf %54, %56 : vector<2x256xf32>
    %c18 = arith.constant 18 : index
    %c0_47 = arith.constant 0 : index
    %58 = vector.load %arg9[%c18, %c0_47] : memref<56x256xf32, #tpu.memory_space<vmem>>, vector<2x256xf32>
    tpu.vector_store %arg9[%c18, %c0_47], %57 {strides = array<i32>} : memref<56x256xf32, #tpu.memory_space<vmem>>, vector<2x256xf32>,
    %c4_48 = arith.constant 4 : index
    %c17 = arith.constant 17 : index
    %59 = vector.load %arg8[%c4_48, %c17] : memref<8x358xf32, #tpu.memory_space<vmem>>, vector<2x256xf32>
    %c9 = arith.constant 9 : index
    %c0_49 = arith.constant 0 : index
    %60 = vector.load %arg6[%c9, %c0_49] : memref<27x256xf32, #tpu.memory_space<vmem>>, vector<1x256xf32>
    %61 = vector.broadcast %60 : vector<1x256xf32> to vector<2x256xf32>
    %62 = arith.mulf %59, %61 : vector<2x256xf32>
    %c20 = arith.constant 20 : index
    %c0_50 = arith.constant 0 : index
    %63 = vector.load %arg9[%c20, %c0_50] : memref<56x256xf32, #tpu.memory_space<vmem>>, vector<2x256xf32>
    tpu.vector_store %arg9[%c20, %c0_50], %62 {strides = array<i32>} : memref<56x256xf32, #tpu.memory_space<vmem>>, vector<2x256xf32>,
    %c4_51 = arith.constant 4 : index
    %c19 = arith.constant 19 : index
    %64 = vector.load %arg8[%c4_51, %c19] : memref<8x358xf32, #tpu.memory_space<vmem>>, vector<2x256xf32>
    %c10_52 = arith.constant 10 : index
    %c0_53 = arith.constant 0 : index
    %65 = vector.load %arg6[%c10_52, %c0_53] : memref<27x256xf32, #tpu.memory_space<vmem>>, vector<1x256xf32>
    %66 = vector.broadcast %65 : vector<1x256xf32> to vector<2x256xf32>
    %67 = arith.mulf %64, %66 : vector<2x256xf32>
    %c22 = arith.constant 22 : index
    %c0_54 = arith.constant 0 : index
    %68 = vector.load %arg9[%c22, %c0_54] : memref<56x256xf32, #tpu.memory_space<vmem>>, vector<2x256xf32>
    tpu.vector_store %arg9[%c22, %c0_54], %67 {strides = array<i32>} : memref<56x256xf32, #tpu.memory_space<vmem>>, vector<2x256xf32>,
    %c4_55 = arith.constant 4 : index
    %c21 = arith.constant 21 : index
    %69 = vector.load %arg8[%c4_55, %c21] : memref<8x358xf32, #tpu.memory_space<vmem>>, vector<2x256xf32>
    %c11 = arith.constant 11 : index
    %c0_56 = arith.constant 0 : index
    %70 = vector.load %arg6[%c11, %c0_56] : memref<27x256xf32, #tpu.memory_space<vmem>>, vector<1x256xf32>
    %71 = vector.broadcast %70 : vector<1x256xf32> to vector<2x256xf32>
    %72 = arith.mulf %69, %71 : vector<2x256xf32>
    %c24 = arith.constant 24 : index
    %c0_57 = arith.constant 0 : index
    %73 = vector.load %arg9[%c24, %c0_57] : memref<56x256xf32, #tpu.memory_space<vmem>>, vector<2x256xf32>
    tpu.vector_store %arg9[%c24, %c0_57], %72 {strides = array<i32>} : memref<56x256xf32, #tpu.memory_space<vmem>>, vector<2x256xf32>,
    %c4_58 = arith.constant 4 : index
    %c49 = arith.constant 49 : index
    %74 = vector.load %arg8[%c4_58, %c49] : memref<8x358xf32, #tpu.memory_space<vmem>>, vector<2x256xf32>
    %c12_59 = arith.constant 12 : index
    %c0_60 = arith.constant 0 : index
    %75 = vector.load %arg6[%c12_59, %c0_60] : memref<27x256xf32, #tpu.memory_space<vmem>>, vector<1x256xf32>
    %76 = vector.broadcast %75 : vector<1x256xf32> to vector<2x256xf32>
    %77 = arith.mulf %74, %76 : vector<2x256xf32>
    %c26 = arith.constant 26 : index
    %c0_61 = arith.constant 0 : index
    %78 = vector.load %arg9[%c26, %c0_61] : memref<56x256xf32, #tpu.memory_space<vmem>>, vector<2x256xf32>
    tpu.vector_store %arg9[%c26, %c0_61], %77 {strides = array<i32>} : memref<56x256xf32, #tpu.memory_space<vmem>>, vector<2x256xf32>,
    %c4_62 = arith.constant 4 : index
    %c51_63 = arith.constant 51 : index
    %79 = vector.load %arg8[%c4_62, %c51_63] : memref<8x358xf32, #tpu.memory_space<vmem>>, vector<2x256xf32>
    %c13 = arith.constant 13 : index
    %c0_64 = arith.constant 0 : index
    %80 = vector.load %arg6[%c13, %c0_64] : memref<27x256xf32, #tpu.memory_space<vmem>>, vector<1x256xf32>
    %81 = vector.broadcast %80 : vector<1x256xf32> to vector<2x256xf32>
    %82 = arith.mulf %79, %81 : vector<2x256xf32>
    %c28 = arith.constant 28 : index
    %c0_65 = arith.constant 0 : index
    %83 = vector.load %arg9[%c28, %c0_65] : memref<56x256xf32, #tpu.memory_space<vmem>>, vector<2x256xf32>
    tpu.vector_store %arg9[%c28, %c0_65], %82 {strides = array<i32>} : memref<56x256xf32, #tpu.memory_space<vmem>>, vector<2x256xf32>,
    %c4_66 = arith.constant 4 : index
    %c53 = arith.constant 53 : index
    %84 = vector.load %arg8[%c4_66, %c53] : memref<8x358xf32, #tpu.memory_space<vmem>>, vector<2x256xf32>
    %c14_67 = arith.constant 14 : index
    %c0_68 = arith.constant 0 : index
    %85 = vector.load %arg6[%c14_67, %c0_68] : memref<27x256xf32, #tpu.memory_space<vmem>>, vector<1x256xf32>
    %86 = vector.broadcast %85 : vector<1x256xf32> to vector<2x256xf32>
    %87 = arith.mulf %84, %86 : vector<2x256xf32>
    %c30 = arith.constant 30 : index
    %c0_69 = arith.constant 0 : index
    %88 = vector.load %arg9[%c30, %c0_69] : memref<56x256xf32, #tpu.memory_space<vmem>>, vector<2x256xf32>
    tpu.vector_store %arg9[%c30, %c0_69], %87 {strides = array<i32>} : memref<56x256xf32, #tpu.memory_space<vmem>>, vector<2x256xf32>,
    %c4_70 = arith.constant 4 : index
    %c81 = arith.constant 81 : index
    %89 = vector.load %arg8[%c4_70, %c81] : memref<8x358xf32, #tpu.memory_space<vmem>>, vector<2x256xf32>
    %c15 = arith.constant 15 : index
    %c0_71 = arith.constant 0 : index
    %90 = vector.load %arg6[%c15, %c0_71] : memref<27x256xf32, #tpu.memory_space<vmem>>, vector<1x256xf32>
    %91 = vector.broadcast %90 : vector<1x256xf32> to vector<2x256xf32>
    %92 = arith.mulf %89, %91 : vector<2x256xf32>
    %c32 = arith.constant 32 : index
    %c0_72 = arith.constant 0 : index
    %93 = vector.load %arg9[%c32, %c0_72] : memref<56x256xf32, #tpu.memory_space<vmem>>, vector<2x256xf32>
    tpu.vector_store %arg9[%c32, %c0_72], %92 {strides = array<i32>} : memref<56x256xf32, #tpu.memory_space<vmem>>, vector<2x256xf32>,
    %c4_73 = arith.constant 4 : index
    %c83 = arith.constant 83 : index
    %94 = vector.load %arg8[%c4_73, %c83] : memref<8x358xf32, #tpu.memory_space<vmem>>, vector<2x256xf32>
    %c16_74 = arith.constant 16 : index
    %c0_75 = arith.constant 0 : index
    %95 = vector.load %arg6[%c16_74, %c0_75] : memref<27x256xf32, #tpu.memory_space<vmem>>, vector<1x256xf32>
    %96 = vector.broadcast %95 : vector<1x256xf32> to vector<2x256xf32>
    %97 = arith.mulf %94, %96 : vector<2x256xf32>
    %c34_76 = arith.constant 34 : index
    %c0_77 = arith.constant 0 : index
    %98 = vector.load %arg9[%c34_76, %c0_77] : memref<56x256xf32, #tpu.memory_space<vmem>>, vector<2x256xf32>
    tpu.vector_store %arg9[%c34_76, %c0_77], %97 {strides = array<i32>} : memref<56x256xf32, #tpu.memory_space<vmem>>, vector<2x256xf32>,
    %c4_78 = arith.constant 4 : index
    %c85 = arith.constant 85 : index
    %99 = vector.load %arg8[%c4_78, %c85] : memref<8x358xf32, #tpu.memory_space<vmem>>, vector<2x256xf32>
    %c17_79 = arith.constant 17 : index
    %c0_80 = arith.constant 0 : index
    %100 = vector.load %arg6[%c17_79, %c0_80] : memref<27x256xf32, #tpu.memory_space<vmem>>, vector<1x256xf32>
    %101 = vector.broadcast %100 : vector<1x256xf32> to vector<2x256xf32>
    %102 = arith.mulf %99, %101 : vector<2x256xf32>
    %c36_81 = arith.constant 36 : index
    %c0_82 = arith.constant 0 : index
    %103 = vector.load %arg9[%c36_81, %c0_82] : memref<56x256xf32, #tpu.memory_space<vmem>>, vector<2x256xf32>
    tpu.vector_store %arg9[%c36_81, %c0_82], %102 {strides = array<i32>} : memref<56x256xf32, #tpu.memory_space<vmem>>, vector<2x256xf32>,
    %c6_83 = arith.constant 6 : index
    %c0_84 = arith.constant 0 : index
    %104 = vector.load %arg8[%c6_83, %c0_84] : memref<8x358xf32, #tpu.memory_space<vmem>>, vector<2x256xf32>
    %c18_85 = arith.constant 18 : index
    %c0_86 = arith.constant 0 : index
    %105 = vector.load %arg6[%c18_85, %c0_86] : memref<27x256xf32, #tpu.memory_space<vmem>>, vector<1x256xf32>
    %106 = vector.broadcast %105 : vector<1x256xf32> to vector<2x256xf32>
    %107 = arith.mulf %104, %106 : vector<2x256xf32>
    %c38 = arith.constant 38 : index
    %c0_87 = arith.constant 0 : index
    %108 = vector.load %arg9[%c38, %c0_87] : memref<56x256xf32, #tpu.memory_space<vmem>>, vector<2x256xf32>
    tpu.vector_store %arg9[%c38, %c0_87], %107 {strides = array<i32>} : memref<56x256xf32, #tpu.memory_space<vmem>>, vector<2x256xf32>,
    %c6_88 = arith.constant 6 : index
    %c3_89 = arith.constant 3 : index
    %109 = vector.load %arg8[%c6_88, %c3_89] : memref<8x358xf32, #tpu.memory_space<vmem>>, vector<2x256xf32>
    %c19_90 = arith.constant 19 : index
    %c0_91 = arith.constant 0 : index
    %110 = vector.load %arg6[%c19_90, %c0_91] : memref<27x256xf32, #tpu.memory_space<vmem>>, vector<1x256xf32>
    %111 = vector.broadcast %110 : vector<1x256xf32> to vector<2x256xf32>
    %112 = arith.mulf %109, %111 : vector<2x256xf32>
    %c40 = arith.constant 40 : index
    %c0_92 = arith.constant 0 : index
    %113 = vector.load %arg9[%c40, %c0_92] : memref<56x256xf32, #tpu.memory_space<vmem>>, vector<2x256xf32>
    tpu.vector_store %arg9[%c40, %c0_92], %112 {strides = array<i32>} : memref<56x256xf32, #tpu.memory_space<vmem>>, vector<2x256xf32>,
    %c6_93 = arith.constant 6 : index
    %c6_94 = arith.constant 6 : index
    %114 = vector.load %arg8[%c6_93, %c6_94] : memref<8x358xf32, #tpu.memory_space<vmem>>, vector<2x256xf32>
    %c20_95 = arith.constant 20 : index
    %c0_96 = arith.constant 0 : index
    %115 = vector.load %arg6[%c20_95, %c0_96] : memref<27x256xf32, #tpu.memory_space<vmem>>, vector<1x256xf32>
    %116 = vector.broadcast %115 : vector<1x256xf32> to vector<2x256xf32>
    %117 = arith.mulf %114, %116 : vector<2x256xf32>
    %c42 = arith.constant 42 : index
    %c0_97 = arith.constant 0 : index
    %118 = vector.load %arg9[%c42, %c0_97] : memref<56x256xf32, #tpu.memory_space<vmem>>, vector<2x256xf32>
    tpu.vector_store %arg9[%c42, %c0_97], %117 {strides = array<i32>} : memref<56x256xf32, #tpu.memory_space<vmem>>, vector<2x256xf32>,
    %c6_98 = arith.constant 6 : index
    %c48 = arith.constant 48 : index
    %119 = vector.load %arg8[%c6_98, %c48] : memref<8x358xf32, #tpu.memory_space<vmem>>, vector<2x256xf32>
    %c21_99 = arith.constant 21 : index
    %c0_100 = arith.constant 0 : index
    %120 = vector.load %arg6[%c21_99, %c0_100] : memref<27x256xf32, #tpu.memory_space<vmem>>, vector<1x256xf32>
    %121 = vector.broadcast %120 : vector<1x256xf32> to vector<2x256xf32>
    %122 = arith.mulf %119, %121 : vector<2x256xf32>
    %c44 = arith.constant 44 : index
    %c0_101 = arith.constant 0 : index
    %123 = vector.load %arg9[%c44, %c0_101] : memref<56x256xf32, #tpu.memory_space<vmem>>, vector<2x256xf32>
    tpu.vector_store %arg9[%c44, %c0_101], %122 {strides = array<i32>} : memref<56x256xf32, #tpu.memory_space<vmem>>, vector<2x256xf32>,
    %c6_102 = arith.constant 6 : index
    %c51_103 = arith.constant 51 : index
    %124 = vector.load %arg8[%c6_102, %c51_103] : memref<8x358xf32, #tpu.memory_space<vmem>>, vector<2x256xf32>
    %c22_104 = arith.constant 22 : index
    %c0_105 = arith.constant 0 : index
    %125 = vector.load %arg6[%c22_104, %c0_105] : memref<27x256xf32, #tpu.memory_space<vmem>>, vector<1x256xf32>
    %126 = vector.broadcast %125 : vector<1x256xf32> to vector<2x256xf32>
    %127 = arith.mulf %124, %126 : vector<2x256xf32>
    %c46 = arith.constant 46 : index
    %c0_106 = arith.constant 0 : index
    %128 = vector.load %arg9[%c46, %c0_106] : memref<56x256xf32, #tpu.memory_space<vmem>>, vector<2x256xf32>
    tpu.vector_store %arg9[%c46, %c0_106], %127 {strides = array<i32>} : memref<56x256xf32, #tpu.memory_space<vmem>>, vector<2x256xf32>,
    %c6_107 = arith.constant 6 : index
    %c54 = arith.constant 54 : index
    %129 = vector.load %arg8[%c6_107, %c54] : memref<8x358xf32, #tpu.memory_space<vmem>>, vector<2x256xf32>
    %c23 = arith.constant 23 : index
    %c0_108 = arith.constant 0 : index
    %130 = vector.load %arg6[%c23, %c0_108] : memref<27x256xf32, #tpu.memory_space<vmem>>, vector<1x256xf32>
    %131 = vector.broadcast %130 : vector<1x256xf32> to vector<2x256xf32>
    %132 = arith.mulf %129, %131 : vector<2x256xf32>
    %c48_109 = arith.constant 48 : index
    %c0_110 = arith.constant 0 : index
    %133 = vector.load %arg9[%c48_109, %c0_110] : memref<56x256xf32, #tpu.memory_space<vmem>>, vector<2x256xf32>
    tpu.vector_store %arg9[%c48_109, %c0_110], %132 {strides = array<i32>} : memref<56x256xf32, #tpu.memory_space<vmem>>, vector<2x256xf32>,
    %c6_111 = arith.constant 6 : index
    %c96 = arith.constant 96 : index
    %134 = vector.load %arg8[%c6_111, %c96] : memref<8x358xf32, #tpu.memory_space<vmem>>, vector<2x256xf32>
    %c24_112 = arith.constant 24 : index
    %c0_113 = arith.constant 0 : index
    %135 = vector.load %arg6[%c24_112, %c0_113] : memref<27x256xf32, #tpu.memory_space<vmem>>, vector<1x256xf32>
    %136 = vector.broadcast %135 : vector<1x256xf32> to vector<2x256xf32>
    %137 = arith.mulf %134, %136 : vector<2x256xf32>
    %c50_114 = arith.constant 50 : index
    %c0_115 = arith.constant 0 : index
    %138 = vector.load %arg9[%c50_114, %c0_115] : memref<56x256xf32, #tpu.memory_space<vmem>>, vector<2x256xf32>
    tpu.vector_store %arg9[%c50_114, %c0_115], %137 {strides = array<i32>} : memref<56x256xf32, #tpu.memory_space<vmem>>, vector<2x256xf32>,
    %c6_116 = arith.constant 6 : index
    %c99 = arith.constant 99 : index
    %139 = vector.load %arg8[%c6_116, %c99] : memref<8x358xf32, #tpu.memory_space<vmem>>, vector<2x256xf32>
    %c25 = arith.constant 25 : index
    %c0_117 = arith.constant 0 : index
    %140 = vector.load %arg6[%c25, %c0_117] : memref<27x256xf32, #tpu.memory_space<vmem>>, vector<1x256xf32>
    %141 = vector.broadcast %140 : vector<1x256xf32> to vector<2x256xf32>
    %142 = arith.mulf %139, %141 : vector<2x256xf32>
    %c52_118 = arith.constant 52 : index
    %c0_119 = arith.constant 0 : index
    %143 = vector.load %arg9[%c52_118, %c0_119] : memref<56x256xf32, #tpu.memory_space<vmem>>, vector<2x256xf32>
    tpu.vector_store %arg9[%c52_118, %c0_119], %142 {strides = array<i32>} : memref<56x256xf32, #tpu.memory_space<vmem>>, vector<2x256xf32>,
    %c6_120 = arith.constant 6 : index
    %c102 = arith.constant 102 : index
    %144 = vector.load %arg8[%c6_120, %c102] : memref<8x358xf32, #tpu.memory_space<vmem>>, vector<2x256xf32>
    %c26_121 = arith.constant 26 : index
    %c0_122 = arith.constant 0 : index
    %145 = vector.load %arg6[%c26_121, %c0_122] : memref<27x256xf32, #tpu.memory_space<vmem>>, vector<1x256xf32>
    %146 = vector.broadcast %145 : vector<1x256xf32> to vector<2x256xf32>
    %147 = arith.mulf %144, %146 : vector<2x256xf32>
    %c54_123 = arith.constant 54 : index
    %c0_124 = arith.constant 0 : index
    %148 = vector.load %arg9[%c54_123, %c0_124] : memref<56x256xf32, #tpu.memory_space<vmem>>, vector<2x256xf32>
    tpu.vector_store %arg9[%c54_123, %c0_124], %147 {strides = array<i32>} : memref<56x256xf32, #tpu.memory_space<vmem>>, vector<2x256xf32>,
    %c0_125 = arith.constant 0 : index
    %c0_126 = arith.constant 0 : index
    %149 = vector.load %arg4[%c0_125, %c0_126] : memref<8x56xf32, #tpu.memory_space<vmem>>, vector<8x56xf32>
    %c0_127 = arith.constant 0 : index
    %c0_128 = arith.constant 0 : index
    %150 = vector.load %arg9[%c0_127, %c0_128] : memref<56x256xf32, #tpu.memory_space<vmem>>, vector<56x256xf32>
    %cst_129 = arith.constant dense<0.000000e+00> : vector<8x256xf32>
    %151 = tpu.matmul %149, %150, %cst_129 {dimension_numbers = #tpu.dot_dimension_numbers<[1], [0], [0], [1], [0, 0, 1, 1], [], []>} : vector<8x56xf32>, vector<56x256xf32>, vector<8x256xf32> -> vector<8x256xf32>
    %c0_130 = arith.constant 0 : index
    %c0_131 = arith.constant 0 : index
    %152 = vector.load %arg5[%c0_130, %c0_131] : memref<8x1xf32, #tpu.memory_space<vmem>>, vector<8x1xf32>
    %153 = vector.broadcast %152 : vector<8x1xf32> to vector<8x256xf32>
    %154 = arith.addf %151, %153 : vector<8x256xf32>
    %c0_132 = arith.constant 0 : index
    %c0_133 = arith.constant 0 : index
    %c0_134 = arith.constant 0 : index
    %155 = vector.load %arg7[%c0_132, %c0_133, %c0_134] : memref<1x8x256xf32, #tpu.memory_space<vmem>>, vector<1x8x256xf32>
    %156 = vector.shape_cast %155 : vector<1x8x256xf32> to vector<8x256xf32>
    %157 = vector.shape_cast %154 : vector<8x256xf32> to vector<1x8x256xf32>
    tpu.vector_store %arg7[%c0_132, %c0_133, %c0_134], %157 {strides = array<i32>} : memref<1x8x256xf32, #tpu.memory_space<vmem>>, vector<1x8x256xf32>,
    return
  }
  func.func @transform_0(%arg0: i32) -> (i32, i32, i32) {
    %c0_i32 = arith.constant 0 : i32
    %c0_i32_0 = arith.constant 0 : i32
    %c0_i32_1 = arith.constant 0 : i32
    return %arg0, %c0_i32, %c0_i32_0 : i32, i32, i32
  }
  func.func @transform_1(%arg0: i32) -> (i32, i32) {
    %c0_i32 = arith.constant 0 : i32
    %c0_i32_0 = arith.constant 0 : i32
    %c0_i32_1 = arith.constant 0 : i32
    return %c0_i32, %c0_i32_0 : i32, i32
  }
  func.func @transform_2(%arg0: i32) -> (i32, i32) {
    %c0_i32 = arith.constant 0 : i32
    %c0_i32_0 = arith.constant 0 : i32
    %c0_i32_1 = arith.constant 0 : i32
    return %c0_i32, %c0_i32_0 : i32, i32
  }
  func.func @transform_3(%arg0: i32) -> (i32, i32) {
    %c0_i32 = arith.constant 0 : i32
    %c0_i32_0 = arith.constant 0 : i32
    %c0_i32_1 = arith.constant 0 : i32
    return %c0_i32, %c0_i32_0 : i32, i32
  }
  func.func @transform_4(%arg0: i32) -> (i32, i32) {
    %c0_i32 = arith.constant 0 : i32
    %c0_i32_0 = arith.constant 0 : i32
    %c0_i32_1 = arith.constant 0 : i32
    return %c0_i32, %c0_i32_0 : i32, i32
  }
  func.func @transform_5(%arg0: i32) -> (i32, i32) {
    %c0_i32 = arith.constant 0 : i32
    %c0_i32_0 = arith.constant 0 : i32
    %c0_i32_1 = arith.constant 0 : i32
    return %c0_i32, %c0_i32_0 : i32, i32
  }
  func.func @transform_6(%arg0: i32) -> (i32, i32, i32) {
    %c0_i32 = arith.constant 0 : i32
    %c0_i32_0 = arith.constant 0 : i32
    %c0_i32_1 = arith.constant 0 : i32
    return %arg0, %c0_i32, %c0_i32_0 : i32, i32, i32
  }
}

</mosaic_0001>

<llo_original>
// kernel: dilated_inception_forward.1
$region0: #{dilated_inception_forward.1}
  #allocation0 [shape = 'u32[]', space=smem, size = 0x4, offset = 0x4, fixed_abs, tag = 'smem constant byte address 0x4 - core index']
  #allocation1 [shape = 'u32[144,128]{1,0:T(1,128)}', space=vmem, size = 0x12000, scoped, tag = 'internal scratch']
  #allocation2 [shape = 'f32[8,358]{1,0:T(8,128)}', space=vmem, size = 0x3000, scoped, tag = 'scratch operand']
  #allocation3 [shape = 'f32[56,256]{1,0:T(8,128)}', space=vmem, size = 0xe000, scoped, tag = 'scratch operand']
  %s0 = inlined_call_operand.vmem [shape: f32[2,4,256], index: 0, kind: input, shape index: {}]
  %s1 = inlined_call_operand.vmem [shape: f32[8,4], index: 1, kind: input, shape index: {}]
  %s2 = inlined_call_operand.vmem [shape: f32[8,1], index: 2, kind: input, shape index: {}]
  %s3 = inlined_call_operand.vmem [shape: f32[8,56], index: 3, kind: input, shape index: {}]
  %s4 = inlined_call_operand.vmem [shape: f32[8,1], index: 4, kind: input, shape index: {}]
  %s5 = inlined_call_operand.vmem [shape: f32[27,256], index: 5, kind: input, shape index: {}]
  %s6 = inlined_call_operand.vmem [shape: f32[2,8,256], index: 6, kind: output, shape index: {}]
  %s7 = sld [smem:[#allocation0]]
  $region57: #{dilated_inception_forward.1} parent=0
    _
  %s9 = ssub.s32 1, %s7
  %s10 = scalar_select 0, %s9, %s7
  loop: start=0, step=1, limit=4
  $region2: #{dilated_inception_forward.1} parent=0 // loop_pre_header
    _
  $region3: #{dilated_inception_forward.1} parent=0 // loop_header
    %s12 = sphi 0, %s16
    %p13 = scmp.ge.s32.totalorder %s12, 4
    %s22 = sphi 0, %s24
    %s25 = sphi 0, %s22
    %s26 = sphi 0, %s25
    %s42 = sphi 0, %s26
    %s46 = sphi 0, %s46
    %s48 = sphi 0, %s46
    %s49 = sphi 0, %s48
    %s63 = sphi 0, %s49
    %s67 = sphi 0, %s67
    %s69 = sphi 0, %s67
    %s70 = sphi 0, %s69
    %s84 = sphi 0, %s70
    %s88 = sphi 0, %s88
    %s90 = sphi 0, %s88
    %s91 = sphi 0, %s90
    %s105 = sphi 0, %s91
    %s109 = sphi 0, %s109
    %s111 = sphi 0, %s109
    %s112 = sphi 0, %s111
    %s126 = sphi 0, %s112
    %s130 = sphi 0, %s130
    %s132 = sphi 0, %s130
    %s133 = sphi 0, %s132
    %s147 = sphi 0, %s133
    %s153 = sphi 0, %s155
    %s156 = sphi 0, %s153
    %s157 = sphi 0, %s156
    %s173 = sphi 0, %s157
  $region4: #{dilated_inception_forward.1} parent=0 // loop_header_branch
    %15 = sbr.rel (%p13) target = $region8
  $region5: #{dilated_inception_forward.1} parent=0 // loop_body
    %s17 = ssub.s32 %s12, 1
    %s18 = ssub.s32 %s12, 2
    %s19 = sadd.s32 %s12, 1
    %s20 = ssub.s32 %s12, %s19
    %p21 = scmp.eq.s32.totalorder %s20, 0
    %s23 = sadd.s32 %s22, 1
    %s24 = scalar_select %p21, %s22, %s23
    %p27 = pneg %p21
    %p28 = scmp.eq.s32.totalorder %s12, 1
    %p29 = por %p27, %p28
    %p30 = scmp.ne.s32.totalorder %s22, %s25
    %p31 = scmp.eq.s32.totalorder %s12, 0
    %p32 = por %p30, %p31
    %p33 = scmp.ne.s32.totalorder %s22, %s25
    %p34 = scmp.eq.s32.totalorder %s17, 1
    %p35 = por %p33, %p34
    %p36 = scmp.ne.s32.totalorder %s25, %s26
    %p37 = scmp.eq.s32.totalorder %s17, 0
    %p38 = por %p36, %p37
    %p39 = scmp.ne.s32.totalorder %s25, %s26
    %p40 = scmp.eq.s32.totalorder %s18, 1
    %p41 = por %p39, %p40
    %p43 = scmp.ne.s32.totalorder %s26, %s42
    %p44 = scmp.eq.s32.totalorder %s18, 0
    %p45 = por %p43, %p44
    %s47 = sadd.s32 %s46, 1
    %p50 = scmp.eq.s32.totalorder %s12, 1
    %p51 = scmp.ne.s32.totalorder %s46, %s48
    %p52 = scmp.eq.s32.totalorder %s12, 0
    %p53 = por %p51, %p52
    %p54 = scmp.ne.s32.totalorder %s46, %s48
    %p55 = scmp.eq.s32.totalorder %s17, 1
    %p56 = por %p54, %p55
    %p57 = scmp.ne.s32.totalorder %s48, %s49
    %p58 = scmp.eq.s32.totalorder %s17, 0
    %p59 = por %p57, %p58
    %p60 = scmp.ne.s32.totalorder %s48, %s49
    %p61 = scmp.eq.s32.totalorder %s18, 1
    %p62 = por %p60, %p61
    %p64 = scmp.ne.s32.totalorder %s49, %s63
    %p65 = scmp.eq.s32.totalorder %s18, 0
    %p66 = por %p64, %p65
    %s68 = sadd.s32 %s67, 1
    %p71 = scmp.eq.s32.totalorder %s12, 1
    %p72 = scmp.ne.s32.totalorder %s67, %s69
    %p73 = scmp.eq.s32.totalorder %s12, 0
    %p74 = por %p72, %p73
    %p75 = scmp.ne.s32.totalorder %s67, %s69
    %p76 = scmp.eq.s32.totalorder %s17, 1
    %p77 = por %p75, %p76
    %p78 = scmp.ne.s32.totalorder %s69, %s70
    %p79 = scmp.eq.s32.totalorder %s17, 0
    %p80 = por %p78, %p79
    %p81 = scmp.ne.s32.totalorder %s69, %s70
    %p82 = scmp.eq.s32.totalorder %s18, 1
    %p83 = por %p81, %p82
    %p85 = scmp.ne.s32.totalorder %s70, %s84
    %p86 = scmp.eq.s32.totalorder %s18, 0
    %p87 = por %p85, %p86
    %s89 = sadd.s32 %s88, 1
    %p92 = scmp.eq.s32.totalorder %s12, 1
    %p93 = scmp.ne.s32.totalorder %s88, %s90
    %p94 = scmp.eq.s32.totalorder %s12, 0
    %p95 = por %p93, %p94
    %p96 = scmp.ne.s32.totalorder %s88, %s90
    %p97 = scmp.eq.s32.totalorder %s17, 1
    %p98 = por %p96, %p97
    %p99 = scmp.ne.s32.totalorder %s90, %s91
    %p100 = scmp.eq.s32.totalorder %s17, 0
    %p101 = por %p99, %p100
    %p102 = scmp.ne.s32.totalorder %s90, %s91
    %p103 = scmp.eq.s32.totalorder %s18, 1
    %p104 = por %p102, %p103
    %p106 = scmp.ne.s32.totalorder %s91, %s105
    %p107 = scmp.eq.s32.totalorder %s18, 0
    %p108 = por %p106, %p107
    %s110 = sadd.s32 %s109, 1
    %p113 = scmp.eq.s32.totalorder %s12, 1
    %p114 = scmp.ne.s32.totalorder %s109, %s111
    %p115 = scmp.eq.s32.totalorder %s12, 0
    %p116 = por %p114, %p115
    %p117 = scmp.ne.s32.totalorder %s109, %s111
    %p118 = scmp.eq.s32.totalorder %s17, 1
    %p119 = por %p117, %p118
    %p120 = scmp.ne.s32.totalorder %s111, %s112
    %p121 = scmp.eq.s32.totalorder %s17, 0
    %p122 = por %p120, %p121
    %p123 = scmp.ne.s32.totalorder %s111, %s112
    %p124 = scmp.eq.s32.totalorder %s18, 1
    %p125 = por %p123, %p124
    %p127 = scmp.ne.s32.totalorder %s112, %s126
    %p128 = scmp.eq.s32.totalorder %s18, 0
    %p129 = por %p127, %p128
    %s131 = sadd.s32 %s130, 1
    %p134 = scmp.eq.s32.totalorder %s12, 1
    %p135 = scmp.ne.s32.totalorder %s130, %s132
    %p136 = scmp.eq.s32.totalorder %s12, 0
    %p137 = por %p135, %p136
    %p138 = scmp.ne.s32.totalorder %s130, %s132
    %p139 = scmp.eq.s32.totalorder %s17, 1
    %p140 = por %p138, %p139
    %p141 = scmp.ne.s32.totalorder %s132, %s133
    %p142 = scmp.eq.s32.totalorder %s17, 0
    %p143 = por %p141, %p142
    %p144 = scmp.ne.s32.totalorder %s132, %s133
    %p145 = scmp.eq.s32.totalorder %s18, 1
    %p146 = por %p144, %p145
    %p148 = scmp.ne.s32.totalorder %s133, %s147
    %p149 = scmp.eq.s32.totalorder %s18, 0
    %p150 = por %p148, %p149
    %s151 = ssub.s32 %s12, %s19
    %p152 = scmp.eq.s32.totalorder %s151, 0
    %s154 = sadd.s32 %s153, 1
    %s155 = scalar_select %p152, %s153, %s154
    %p158 = pneg %p152
    %p159 = scmp.eq.s32.totalorder %s12, 1
    %p160 = por %p158, %p159
    %p161 = scmp.ne.s32.totalorder %s153, %s156
    %p162 = scmp.eq.s32.totalorder %s12, 0
    %p163 = por %p161, %p162
    %p164 = scmp.ne.s32.totalorder %s153, %s156
    %p165 = scmp.eq.s32.totalorder %s17, 1
    %p166 = por %p164, %p165
    %p167 = scmp.ne.s32.totalorder %s156, %s157
    %p168 = scmp.eq.s32.totalorder %s17, 0
    %p169 = por %p167, %p168
    %p170 = scmp.ne.s32.totalorder %s156, %s157
    %p171 = scmp.eq.s32.totalorder %s18, 1
    %p172 = por %p170, %p171
    %p174 = scmp.ne.s32.totalorder %s157, %s173
    %p175 = scmp.eq.s32.totalorder %s18, 0
    %p176 = por %p174, %p175
    %p177 = scmp.le.s32.totalorder 1, %s12
    %p178 = scmp.lt.s32.totalorder %s12, 3
    %p179 = pnand %p177, %p178
    %p180 = pneg %p179
    // Predicated region
    $region9: #{dilated_inception_forward.1} parent=5 // pred_check
      _
    $region10: #{dilated_inception_forward.1} parent=5 // pred_check_branch
      %182 = sbr.rel (%p179) target = $region12
    $region11: #{dilated_inception_forward.1} parent=5 // pred_region
      %s183 = ssub.s32 %s12, 1
      // Predicated region
      $region13: #{dilated_inception_forward.1} parent=11 // pred_check
        %p184 = pneg %p59
      $region14: #{dilated_inception_forward.1} parent=11 // pred_check_branch
        %186 = sbr.rel (%p184) target = $region16
      $region15: #{dilated_inception_forward.1} parent=11 // pred_region
        _
      $region16: #{dilated_inception_forward.1} parent=11 // pred_fallthru
        _
      // Predicated region
      $region17: #{dilated_inception_forward.1} parent=11 // pred_check
        %p187 = pneg %p80
      $region18: #{dilated_inception_forward.1} parent=11 // pred_check_branch
        %189 = sbr.rel (%p187) target = $region20
      $region19: #{dilated_inception_forward.1} parent=11 // pred_region
        _
      $region20: #{dilated_inception_forward.1} parent=11 // pred_fallthru
        _
      // Predicated region
      $region21: #{dilated_inception_forward.1} parent=11 // pred_check
        %p190 = pneg %p101
      $region22: #{dilated_inception_forward.1} parent=11 // pred_check_branch
        %192 = sbr.rel (%p190) target = $region24
      $region23: #{dilated_inception_forward.1} parent=11 // pred_region
        _
      $region24: #{dilated_inception_forward.1} parent=11 // pred_fallthru
        _
      // Predicated region
      $region25: #{dilated_inception_forward.1} parent=11 // pred_check
        %p193 = pneg %p122
      $region26: #{dilated_inception_forward.1} parent=11 // pred_check_branch
        %195 = sbr.rel (%p193) target = $region28
      $region27: #{dilated_inception_forward.1} parent=11 // pred_region
        _
      $region28: #{dilated_inception_forward.1} parent=11 // pred_fallthru
        _
      // Predicated region
      $region29: #{dilated_inception_forward.1} parent=11 // pred_check
        %p196 = pneg %p143
      $region30: #{dilated_inception_forward.1} parent=11 // pred_check_branch
        %198 = sbr.rel (%p196) target = $region32
      $region31: #{dilated_inception_forward.1} parent=11 // pred_region
        _
      $region32: #{dilated_inception_forward.1} parent=11 // pred_fallthru
        _
    $region12: #{dilated_inception_forward.1} parent=5 // pred_fallthru
      _
    %p199 = scmp.lt.s32.totalorder %s12, 2
    // Predicated region
    $region33: #{dilated_inception_forward.1} parent=5 // pred_check
      %p200 = pneg %p199
    $region34: #{dilated_inception_forward.1} parent=5 // pred_check_branch
      %202 = sbr.rel (%p200) target = $region36
    $region35: #{dilated_inception_forward.1} parent=5 // pred_region
      // Predicated region
      $region37: #{dilated_inception_forward.1} parent=35 // pred_check
        %p203 = pneg %p32
      $region38: #{dilated_inception_forward.1} parent=35 // pred_check_branch
        %205 = sbr.rel (%p203) target = $region40
      $region39: #{dilated_inception_forward.1} parent=35 // pred_region
        %p206 = scmp.lt.s32.totalorder %s12, 1
        %s207 = scalar_select %p206, %s12, 1
        %s208 = smul.addr %s207, 2
        %s209 = smul.addr %s208, 4
        %s210 = scalar_lea.vmem %s0, %s209
      $region40: #{dilated_inception_forward.1} parent=35 // pred_fallthru
        _
    $region36: #{dilated_inception_forward.1} parent=5 // pred_fallthru
      _
    %p211 = scmp.le.s32.totalorder 1, %s12
    %p212 = scmp.lt.s32.totalorder %s12, 3
    %p213 = pnand %p211, %p212
    %p214 = pneg %p213
    // Predicated region
    $region41: #{dilated_inception_forward.1} parent=5 // pred_check
      _
    $region42: #{dilated_inception_forward.1} parent=5 // pred_check_branch
      %216 = sbr.rel (%p213) target = $region44
    $region43: #{dilated_inception_forward.1} parent=5 // pred_region
      %s217 = ssub.s32 %s12, 1
      %p218 = scmp.lt.s32.totalorder %s17, 1
      %s219 = scalar_select %p218, %s17, 1
      %s220 = smul.addr %s219, 2
      %s221 = smul.addr %s220, 4
      %s222 = scalar_lea.vmem %s0, %s221
      %p223 = pneg %p38
      %p224 = pneg %p35
      %p225 = pneg %p59
      %p226 = pneg %p56
      %p227 = pneg %p80
      %p228 = pneg %p77
      %p229 = pneg %p101
      %p230 = pneg %p98
      %p231 = pneg %p122
      %p232 = pneg %p119
      %p233 = pneg %p143
      %p234 = pneg %p140
      %p235 = pneg %p169
      %p236 = pneg %p166
      %p237 = scmp.lt.s32.totalorder %s17, 1
      %s238 = scalar_select %p237, %s17, 1
      %s239 = smul.addr %s238, 2
      %s240 = smul.addr %s239, 8
      %s241 = scalar_lea.vmem %s6, %s240
      %p242 = scmp.lt.s32.totalorder %s17, 1
      %s243 = scalar_select %p242, %s17, 1
      %s244 = smul.addr %s243, 2
      %s245 = smul.addr %s244, 4
      %s246 = scalar_lea.vmem %s0, %s245
      %p247 = scmp.lt.s32.totalorder %s17, 1
      %s248 = scalar_select %p247, %s17, 1
      %s249 = smul.addr %s248, 2
      %s250 = smul.addr %s249, 8
      %s251 = scalar_lea.vmem %s6, %s250
      %v252 = vld [vmem:[%s1] sm:$0xff]
      %v253 = vld [vmem:[%s246] sm:$0xff]
      %v254 = vld [vmem:[%s2] sm:$0xff]
      %256 = vset.pattern.permute.xlu0 0
      %257 = vperm.xlu0 %256, %v254
      %v258 = vpop.permute.xlu0 %257
      %v261 = vcombine.high %v253, %v253
      %vm262 = vcmask 31744
      %v264 = vsel %vm262, %v252, 0
      %vm266 = vcmask 1043456
      %v267 = vsel %vm266, %v253, 0
      %v269 = vsel %vm266, %v261, 0
      %271 = vmatprep.subr.mxu0 0.0
      %272 = vmatpush1.msra.mxu0 0.0
      %273 = vmatprep.subr.mxu0 0.0
      %274 = vmatpush1.msra.mxu0 0.0
      %275 = vmatprep.subr.mxu0 0.0
      %276 = vmatpush1.msra.mxu0 0.0
      %277 = vmatprep.subr.mxu0 0.0
      %278 = vmatpush1.msra.mxu0 0.0
      %279 = vmatprep.subr.mxu0 0.0
      %280 = vmatpush1.msra.mxu0 0.0
      %281 = vmatprep.subr.mxu0 0.0
      %282 = vmatpush1.msra.mxu0 0.0
      %283 = vmatprep.subr.mxu0 0.0
      %284 = vmatpush1.msra.mxu0 0.0
      %285 = vmatprep.subr.mxu0 0.0
      %286 = vmatpush1.msra.mxu0 0.0
      %287 = vmatprep.subr.mxu0 0.0
      %288 = vmatpush1.msra.mxu0 0.0
      %289 = vmatprep.subr.mxu0 0.0
      %290 = vmatpush1.msra.mxu0 0.0
      %291 = vmatprep.subr.mxu0 0.0
      %292 = vmatpush1.msra.mxu0 0.0
      %293 = vmatprep.subr.mxu0 0.0
      %294 = vmatpush1.msra.mxu0 0.0
      %295 = vmatprep.subr.mxu0 0.0
      %296 = vmatpush1.msra.mxu0 0.0
      %297 = vmatprep.subr.mxu0 0.0
      %298 = vmatpush1.msra.mxu0 0.0
      %299 = vmatprep.subr.mxu0 0.0
      %300 = vmatpush1.msra.mxu0 0.0
      %301 = vmatprep.subr.mxu0 %v269
      %302 = vmatpush1.msra.mxu0 %v267
      %303 = vmatprep.subr.mxu0 0.0
      %304 = vmatpush2.msra.mxu0 0.0
      %305 = vmatprep.subr.mxu0 0.0
      %306 = vmatpush2.msra.mxu0 0.0
      %307 = vmatprep.subr.mxu0 0.0
      %308 = vmatpush2.msra.mxu0 0.0
      %309 = vmatprep.subr.mxu0 0.0
      %310 = vmatpush2.msra.mxu0 0.0
      %311 = vmatprep.subr.mxu0 0.0
      %312 = vmatpush2.msra.mxu0 0.0
      %313 = vmatprep.subr.mxu0 0.0
      %314 = vmatpush2.msra.mxu0 0.0
      %315 = vmatprep.subr.mxu0 0.0
      %316 = vmatpush2.msra.mxu0 0.0
      %317 = vmatprep.subr.mxu0 0.0
      %318 = vmatpush2.msra.mxu0 0.0
      %319 = vmatprep.subr.mxu0 0.0
      %320 = vmatpush2.msra.mxu0 0.0
      %321 = vmatprep.subr.mxu0 0.0
      %322 = vmatpush2.msra.mxu0 0.0
      %323 = vmatprep.subr.mxu0 0.0
      %324 = vmatpush2.msra.mxu0 0.0
      %325 = vmatprep.subr.mxu0 0.0
      %326 = vmatpush2.msra.mxu0 0.0
      %327 = vmatprep.subr.mxu0 0.0
      %328 = vmatpush2.msra.mxu0 0.0
      %329 = vmatprep.subr.mxu0 0.0
      %330 = vmatpush2.msra.mxu0 0.0
      %331 = vmatprep.subr.mxu0 0.0
      %332 = vmatpush2.msra.mxu0 0.0
      %333 = vmatprep.subr.mxu0 0.0
      %334 = vmatpush2.msra.mxu0 0.0
      %335 = vmatprep.mubr.f32.mxu0 0.0
      %336 = vmatmul.mubr.f32.gmra.mxu0 %v264
      %v337 = vpop.f32.mrf.mxu0
      %v338 = vadd.f32 %v258, %v337
      %v339 = vpop.f32.mrf.mxu0
      %v340 = vadd.f32 %v258, %v339
      %341 = vdwg.mxu0
      %v342 = vmax.f32 %v338, 0.0
      %v343 = vmax.f32 %v340, 0.0
      %344 = vst [vmem:[#allocation2] sm:$0xff] 0.0
      %345 = vst [vmem:[#allocation2 + $0x8] sm:$0xff] 0.0
      %vm346 = vcmask 834560
      %347 = vst.msk [vmem:[#allocation2 + $0x10] sm:$0xff] %vm346, 0.0
      %350 = vrot.lane.b32.xlu0 %v342, 51
      %v351 = vpop.permute.xlu0 %350
      %352 = vrot.lane.b32.xlu0 %v343, 51
      %v353 = vpop.permute.xlu0 %352
      %vm354 = vcmask 416768
      %v355 = vsel %vm354, %v351, %v353
      %vm359 = vcmask 1047960
      %360 = vst.msk [vmem:[#allocation2] sm:$0xff] %vm359, %v351
      %361 = vst [vmem:[#allocation2 + $0x8] sm:$0xff] %v355
      %362 = vst.msk [vmem:[#allocation2 + $0x10] sm:$0xff] %vm354, %v353
      %v363 = vld [vmem:[#allocation2] sm:$0x3]
      %v364 = vld [vmem:[#allocation2 + $0x8] sm:$0x3]
      %v365 = vld [vmem:[#allocation2 + $0x10] sm:$0x3]
      %369 = vrot.lane.b32.xlu0 %v363, 77
      %v370 = vpop.permute.xlu0 %369
      %371 = vrot.lane.b32.xlu0 %v364, 77
      %v372 = vpop.permute.xlu0 %371
      %373 = vrot.lane.b32.xlu0 %v365, 77
      %v374 = vpop.permute.xlu0 %373
      %vm375 = vcmask 629760
      %v376 = vsel %vm375, %v370, %v372
      %v377 = vsel %vm375, %v372, %v374
      %380 = vst [vmem:[#allocation3] sm:$0x3] %v376
      %381 = vst [vmem:[#allocation3 + $0x8] sm:$0x3] %v377
      %v382 = vld [vmem:[#allocation2] sm:$0xc]
      %v383 = vld [vmem:[#allocation2 + $0x8] sm:$0xc]
      %v384 = vld [vmem:[#allocation2 + $0x10] sm:$0xc]
      %v385 = vld [vmem:[%s5] ss:$8 sm:$0x3]
      %v387 = vlaneseq
      %v388 = vshrl.u32 %v387, 7
      %v389 = vsub.s32 0, %v388
      %v390 = vrot.slane %v385, %v389
      %v391 = vlaneseq
      %v392 = vshrl.u32 %v391, 7
      %v393 = vsub.s32 1, %v392
      %v394 = vrot.slane %v385, %v393
      %395 = vrot.lane.b32.xlu0 %v390, 34
      %v396 = vpop.permute.xlu0 %395
      %397 = vrot.lane.b32.xlu0 %v394, 34
      %v398 = vpop.permute.xlu0 %397
      %vm399 = vcmask 277504
      %v400 = vsel %vm399, %v396, %v398
      %v404 = vmul.f32 %v382, %v396
      %v405 = vmul.f32 %v383, %v400
      %v406 = vmul.f32 %v384, %v398
      %410 = vrot.lane.b32.xlu0 %v404, 94
      %v411 = vpop.permute.xlu0 %410
      %412 = vrot.lane.b32.xlu0 %v405, 94
      %v413 = vpop.permute.xlu0 %412
      %414 = vrot.lane.b32.xlu0 %v406, 94
      %v415 = vpop.permute.xlu0 %414
      %vm416 = vcmask 769024
      %v417 = vsel %vm416, %v411, %v413
      %v418 = vsel %vm416, %v413, %v415
      %421 = vst [vmem:[#allocation3] sm:$0xc] %v417
      %422 = vst [vmem:[#allocation3 + $0x8] sm:$0xc] %v418
      %v423 = vld [vmem:[#allocation2] sm:$0xc]
      %v424 = vld [vmem:[#allocation2 + $0x8] sm:$0xc]
      %v425 = vld [vmem:[#allocation2 + $0x10] sm:$0xc]
      %s426 = scalar_lea.vmem %s5, 1
      %v427 = vld [vmem:[%s426] ss:$8 sm:$0x3]
      %v429 = vlaneseq
      %v430 = vshrl.u32 %v429, 7
      %v431 = vsub.s32 0, %v430
      %v432 = vrot.slane %v427, %v431
      %v433 = vlaneseq
      %v434 = vshrl.u32 %v433, 7
      %v435 = vsub.s32 1, %v434
      %v436 = vrot.slane %v427, %v435
      %437 = vrot.lane.b32.xlu0 %v432, 35
      %v438 = vpop.permute.xlu0 %437
      %439 = vrot.lane.b32.xlu0 %v436, 35
      %v440 = vpop.permute.xlu0 %439
      %vm441 = vcmask 285696
      %v442 = vsel %vm441, %v438, %v440
      %v446 = vmul.f32 %v423, %v438
      %v447 = vmul.f32 %v424, %v442
      %v448 = vmul.f32 %v425, %v440
      %v452 = vrot.slane %v446, 6
      %v453 = vrot.slane %v447, 6
      %v454 = vrot.slane %v448, 6
      %455 = vrot.lane.b32.xlu0 %v452, 93
      %v456 = vpop.permute.xlu0 %455
      %457 = vrot.lane.b32.xlu0 %v453, 93
      %v458 = vpop.permute.xlu0 %457
      %459 = vrot.lane.b32.xlu0 %v454, 93
      %v460 = vpop.permute.xlu0 %459
      %vm461 = vcmask 760832
      %v462 = vsel %vm461, %v456, %v458
      %v463 = vsel %vm461, %v458, %v460
      %466 = vst [vmem:[#allocation3] sm:$0x30] %v462
      %467 = vst [vmem:[#allocation3 + $0x8] sm:$0x30] %v463
      %v468 = vld [vmem:[#allocation2] sm:$0xc]
      %v469 = vld [vmem:[#allocation2 + $0x8] sm:$0xc]
      %v470 = vld [vmem:[#allocation2 + $0x10] sm:$0xc]
      %s471 = scalar_lea.vmem %s5, 2
      %v472 = vld [vmem:[%s471] ss:$8 sm:$0x3]
      %v474 = vlaneseq
      %v475 = vshrl.u32 %v474, 7
      %v476 = vsub.s32 0, %v475
      %v477 = vrot.slane %v472, %v476
      %v478 = vlaneseq
      %v479 = vshrl.u32 %v478, 7
      %v480 = vsub.s32 1, %v479
      %v481 = vrot.slane %v472, %v480
      %482 = vrot.lane.b32.xlu0 %v477, 36
      %v483 = vpop.permute.xlu0 %482
      %484 = vrot.lane.b32.xlu0 %v481, 36
      %v485 = vpop.permute.xlu0 %484
      %vm486 = vcmask 293888
      %v487 = vsel %vm486, %v483, %v485
      %v491 = vmul.f32 %v468, %v483
      %v492 = vmul.f32 %v469, %v487
      %v493 = vmul.f32 %v470, %v485
      %v497 = vrot.slane %v491, 4
      %v498 = vrot.slane %v492, 4
      %v499 = vrot.slane %v493, 4
      %500 = vrot.lane.b32.xlu0 %v497, 92
      %v501 = vpop.permute.xlu0 %500
      %502 = vrot.lane.b32.xlu0 %v498, 92
      %v503 = vpop.permute.xlu0 %502
      %504 = vrot.lane.b32.xlu0 %v499, 92
      %v505 = vpop.permute.xlu0 %504
      %vm506 = vcmask 752640
      %v507 = vsel %vm506, %v501, %v503
      %v508 = vsel %vm506, %v503, %v505
      %511 = vst [vmem:[#allocation3] sm:$0xc0] %v507
      %512 = vst [vmem:[#allocation3 + $0x8] sm:$0xc0] %v508
      %v513 = vld [vmem:[#allocation2] sm:$0xc]
      %v514 = vld [vmem:[#allocation2 + $0x8] sm:$0xc]
      %v515 = vld [vmem:[#allocation2 + $0x10] sm:$0xc]
      %s516 = scalar_lea.vmem %s5, 3
      %v517 = vld [vmem:[%s516] ss:$8 sm:$0x3]
      %v519 = vlaneseq
      %v520 = vshrl.u32 %v519, 7
      %v521 = vsub.s32 0, %v520
      %v522 = vrot.slane %v517, %v521
      %v523 = vlaneseq
      %v524 = vshrl.u32 %v523, 7
      %v525 = vsub.s32 1, %v524
      %v526 = vrot.slane %v517, %v525
      %527 = vrot.lane.b32.xlu0 %v522, 50
      %v528 = vpop.permute.xlu0 %527
      %529 = vrot.lane.b32.xlu0 %v526, 50
      %v530 = vpop.permute.xlu0 %529
      %vm531 = vcmask 408576
      %v532 = vsel %vm531, %v528, %v530
      %v536 = vmul.f32 %v513, %v528
      %v537 = vmul.f32 %v514, %v532
      %v538 = vmul.f32 %v515, %v530
      %v542 = vrot.slane %v536, 2
      %v543 = vrot.slane %v537, 2
      %v544 = vrot.slane %v538, 2
      %545 = vrot.lane.b32.xlu0 %v542, 78
      %v546 = vpop.permute.xlu0 %545
      %547 = vrot.lane.b32.xlu0 %v543, 78
      %v548 = vpop.permute.xlu0 %547
      %549 = vrot.lane.b32.xlu0 %v544, 78
      %v550 = vpop.permute.xlu0 %549
      %vm551 = vcmask 637952
      %v552 = vsel %vm551, %v546, %v548
      %v553 = vsel %vm551, %v548, %v550
      %556 = vst [vmem:[#allocation3 + $0x10] sm:$0x3] %v552
      %557 = vst [vmem:[#allocation3 + $0x18] sm:$0x3] %v553
      %v558 = vld [vmem:[#allocation2] sm:$0xc]
      %v559 = vld [vmem:[#allocation2 + $0x8] sm:$0xc]
      %v560 = vld [vmem:[#allocation2 + $0x10] sm:$0xc]
      %s561 = scalar_lea.vmem %s5, 4
      %v562 = vld [vmem:[%s561] ss:$8 sm:$0x3]
      %v564 = vlaneseq
      %v565 = vshrl.u32 %v564, 7
      %v566 = vsub.s32 0, %v565
      %v567 = vrot.slane %v562, %v566
      %v568 = vlaneseq
      %v569 = vshrl.u32 %v568, 7
      %v570 = vsub.s32 1, %v569
      %v571 = vrot.slane %v562, %v570
      %572 = vrot.lane.b32.xlu0 %v567, 51
      %v573 = vpop.permute.xlu0 %572
      %574 = vrot.lane.b32.xlu0 %v571, 51
      %v575 = vpop.permute.xlu0 %574
      %v576 = vsel %vm354, %v573, %v575
      %v580 = vmul.f32 %v558, %v573
      %v581 = vmul.f32 %v559, %v576
      %v582 = vmul.f32 %v560, %v575
      %586 = vrot.lane.b32.xlu0 %v580, 77
      %v587 = vpop.permute.xlu0 %586
      %588 = vrot.lane.b32.xlu0 %v581, 77
      %v589 = vpop.permute.xlu0 %588
      %590 = vrot.lane.b32.xlu0 %v582, 77
      %v591 = vpop.permute.xlu0 %590
      %v592 = vsel %vm375, %v587, %v589
      %v593 = vsel %vm375, %v589, %v591
      %596 = vst [vmem:[#allocation3 + $0x10] sm:$0xc] %v592
      %597 = vst [vmem:[#allocation3 + $0x18] sm:$0xc] %v593
      %v598 = vld [vmem:[#allocation2] sm:$0xc]
      %v599 = vld [vmem:[#allocation2 + $0x8] sm:$0xc]
      %v600 = vld [vmem:[#allocation2 + $0x10] sm:$0xc]
      %s601 = scalar_lea.vmem %s5, 5
      %v602 = vld [vmem:[%s601] ss:$8 sm:$0x3]
      %v604 = vlaneseq
      %v605 = vshrl.u32 %v604, 7
      %v606 = vsub.s32 0, %v605
      %v607 = vrot.slane %v602, %v606
      %v608 = vlaneseq
      %v609 = vshrl.u32 %v608, 7
      %v610 = vsub.s32 1, %v609
      %v611 = vrot.slane %v602, %v610
      %612 = vrot.lane.b32.xlu0 %v607, 52
      %v613 = vpop.permute.xlu0 %612
      %614 = vrot.lane.b32.xlu0 %v611, 52
      %v615 = vpop.permute.xlu0 %614
      %vm616 = vcmask 424960
      %v617 = vsel %vm616, %v613, %v615
      %v621 = vmul.f32 %v598, %v613
      %v622 = vmul.f32 %v599, %v617
      %v623 = vmul.f32 %v600, %v615
      %v627 = vrot.slane %v621, 6
      %v628 = vrot.slane %v622, 6
      %v629 = vrot.slane %v623, 6
      %630 = vrot.lane.b32.xlu0 %v627, 76
      %v631 = vpop.permute.xlu0 %630
      %632 = vrot.lane.b32.xlu0 %v628, 76
      %v633 = vpop.permute.xlu0 %632
      %634 = vrot.lane.b32.xlu0 %v629, 76
      %v635 = vpop.permute.xlu0 %634
      %vm636 = vcmask 621568
      %v637 = vsel %vm636, %v631, %v633
      %v638 = vsel %vm636, %v633, %v635
      %641 = vst [vmem:[#allocation3 + $0x10] sm:$0x30] %v637
      %642 = vst [vmem:[#allocation3 + $0x18] sm:$0x30] %v638
      %v643 = vld [vmem:[#allocation2] sm:$0xc]
      %v644 = vld [vmem:[#allocation2 + $0x8] sm:$0xc]
      %v645 = vld [vmem:[#allocation2 + $0x10] sm:$0xc]
      %s646 = scalar_lea.vmem %s5, 6
      %v647 = vld [vmem:[%s646] ss:$8 sm:$0x3]
      %v649 = vlaneseq
      %v650 = vshrl.u32 %v649, 7
      %v651 = vsub.s32 0, %v650
      %v652 = vrot.slane %v647, %v651
      %v653 = vlaneseq
      %v654 = vshrl.u32 %v653, 7
      %v655 = vsub.s32 1, %v654
      %v656 = vrot.slane %v647, %v655
      %657 = vrot.lane.b32.xlu0 %v652, 66
      %v658 = vpop.permute.xlu0 %657
      %659 = vrot.lane.b32.xlu0 %v656, 66
      %v660 = vpop.permute.xlu0 %659
      %vm661 = vcmask 539648
      %v662 = vsel %vm661, %v658, %v660
      %v666 = vmul.f32 %v643, %v658
      %v667 = vmul.f32 %v644, %v662
      %v668 = vmul.f32 %v645, %v660
      %v672 = vrot.slane %v666, 4
      %v673 = vrot.slane %v667, 4
      %v674 = vrot.slane %v668, 4
      %675 = vrot.lane.b32.xlu0 %v672, 62
      %v676 = vpop.permute.xlu0 %675
      %677 = vrot.lane.b32.xlu0 %v673, 62
      %v678 = vpop.permute.xlu0 %677
      %679 = vrot.lane.b32.xlu0 %v674, 62
      %v680 = vpop.permute.xlu0 %679
      %vm681 = vcmask 506880
      %v682 = vsel %vm681, %v676, %v678
      %v683 = vsel %vm681, %v678, %v680
      %686 = vst [vmem:[#allocation3 + $0x10] sm:$0xc0] %v682
      %687 = vst [vmem:[#allocation3 + $0x18] sm:$0xc0] %v683
      %v688 = vld [vmem:[#allocation2] sm:$0xc]
      %v689 = vld [vmem:[#allocation2 + $0x8] sm:$0xc]
      %v690 = vld [vmem:[#allocation2 + $0x10] sm:$0xc]
      %s691 = scalar_lea.vmem %s5, 7
      %v692 = vld [vmem:[%s691] ss:$8 sm:$0x3]
      %v694 = vlaneseq
      %v695 = vshrl.u32 %v694, 7
      %v696 = vsub.s32 0, %v695
      %v697 = vrot.slane %v692, %v696
      %v698 = vlaneseq
      %v699 = vshrl.u32 %v698, 7
      %v700 = vsub.s32 1, %v699
      %v701 = vrot.slane %v692, %v700
      %702 = vrot.lane.b32.xlu0 %v697, 67
      %v703 = vpop.permute.xlu0 %702
      %704 = vrot.lane.b32.xlu0 %v701, 67
      %v705 = vpop.permute.xlu0 %704
      %vm706 = vcmask 547840
      %v707 = vsel %vm706, %v703, %v705
      %v711 = vmul.f32 %v688, %v703
      %v712 = vmul.f32 %v689, %v707
      %v713 = vmul.f32 %v690, %v705
      %v717 = vrot.slane %v711, 2
      %v718 = vrot.slane %v712, 2
      %v719 = vrot.slane %v713, 2
      %720 = vrot.lane.b32.xlu0 %v717, 61
      %v721 = vpop.permute.xlu0 %720
      %722 = vrot.lane.b32.xlu0 %v718, 61
      %v723 = vpop.permute.xlu0 %722
      %724 = vrot.lane.b32.xlu0 %v719, 61
      %v725 = vpop.permute.xlu0 %724
      %vm726 = vcmask 498688
      %v727 = vsel %vm726, %v721, %v723
      %v728 = vsel %vm726, %v723, %v725
      %731 = vst [vmem:[#allocation3 + $0x20] sm:$0x3] %v727
      %732 = vst [vmem:[#allocation3 + $0x28] sm:$0x3] %v728
      %v733 = vld [vmem:[#allocation2] sm:$0xc]
      %v734 = vld [vmem:[#allocation2 + $0x8] sm:$0xc]
      %v735 = vld [vmem:[#allocation2 + $0x10] sm:$0xc]
      %s736 = scalar_lea.vmem %s5, 16
      %v737 = vld [vmem:[%s736] ss:$8 sm:$0x3]
      %v739 = vlaneseq
      %v740 = vshrl.u32 %v739, 7
      %v741 = vsub.s32 0, %v740
      %v742 = vrot.slane %v737, %v741
      %v743 = vlaneseq
      %v744 = vshrl.u32 %v743, 7
      %v745 = vsub.s32 1, %v744
      %v746 = vrot.slane %v737, %v745
      %747 = vrot.lane.b32.xlu0 %v742, 68
      %v748 = vpop.permute.xlu0 %747
      %749 = vrot.lane.b32.xlu0 %v746, 68
      %v750 = vpop.permute.xlu0 %749
      %vm751 = vcmask 556032
      %v752 = vsel %vm751, %v748, %v750
      %v756 = vmul.f32 %v733, %v748
      %v757 = vmul.f32 %v734, %v752
      %v758 = vmul.f32 %v735, %v750
      %762 = vrot.lane.b32.xlu0 %v756, 60
      %v763 = vpop.permute.xlu0 %762
      %764 = vrot.lane.b32.xlu0 %v757, 60
      %v765 = vpop.permute.xlu0 %764
      %766 = vrot.lane.b32.xlu0 %v758, 60
      %v767 = vpop.permute.xlu0 %766
      %vm768 = vcmask 490496
      %v769 = vsel %vm768, %v763, %v765
      %v770 = vsel %vm768, %v765, %v767
      %773 = vst [vmem:[#allocation3 + $0x20] sm:$0xc] %v769
      %774 = vst [vmem:[#allocation3 + $0x28] sm:$0xc] %v770
      %v775 = vld [vmem:[#allocation2] sm:$0x30]
      %v776 = vld [vmem:[#allocation2 + $0x8] sm:$0x30]
      %v777 = vld [vmem:[#allocation2 + $0x10] sm:$0x30]
      %s778 = scalar_lea.vmem %s5, 17
      %v779 = vld [vmem:[%s778] ss:$8 sm:$0x3]
      %v781 = vlaneseq
      %v782 = vshrl.u32 %v781, 7
      %v783 = vsub.s32 0, %v782
      %v784 = vrot.slane %v779, %v783
      %v785 = vlaneseq
      %v786 = vshrl.u32 %v785, 7
      %v787 = vsub.s32 1, %v786
      %v788 = vrot.slane %v779, %v787
      %789 = vrot.lane.b32.xlu0 %v784, 17
      %v790 = vpop.permute.xlu0 %789
      %791 = vrot.lane.b32.xlu0 %v788, 17
      %v792 = vpop.permute.xlu0 %791
      %vm793 = vcmask 138240
      %v794 = vsel %vm793, %v790, %v792
      %v798 = vmul.f32 %v775, %v790
      %v799 = vmul.f32 %v776, %v794
      %v800 = vmul.f32 %v777, %v792
      %804 = vrot.lane.b32.xlu0 %v798, 111
      %v805 = vpop.permute.xlu0 %804
      %806 = vrot.lane.b32.xlu0 %v799, 111
      %v807 = vpop.permute.xlu0 %806
      %808 = vrot.lane.b32.xlu0 %v800, 111
      %v809 = vpop.permute.xlu0 %808
      %vm810 = vcmask 908288
      %v811 = vsel %vm810, %v805, %v807
      %v812 = vsel %vm810, %v807, %v809
      %815 = vst [vmem:[#allocation3 + $0x20] sm:$0x30] %v811
      %816 = vst [vmem:[#allocation3 + $0x28] sm:$0x30] %v812
      %v817 = vld [vmem:[#allocation2] sm:$0x30]
      %v818 = vld [vmem:[#allocation2 + $0x8] sm:$0x30]
      %v819 = vld [vmem:[#allocation2 + $0x10] sm:$0x30]
      %s820 = scalar_lea.vmem %s5, 18
      %v821 = vld [vmem:[%s820] ss:$8 sm:$0x3]
      %v823 = vlaneseq
      %v824 = vshrl.u32 %v823, 7
      %v825 = vsub.s32 0, %v824
      %v826 = vrot.slane %v821, %v825
      %v827 = vlaneseq
      %v828 = vshrl.u32 %v827, 7
      %v829 = vsub.s32 1, %v828
      %v830 = vrot.slane %v821, %v829
      %831 = vrot.lane.b32.xlu0 %v826, 19
      %v832 = vpop.permute.xlu0 %831
      %833 = vrot.lane.b32.xlu0 %v830, 19
      %v834 = vpop.permute.xlu0 %833
      %vm835 = vcmask 154624
      %v836 = vsel %vm835, %v832, %v834
      %v840 = vmul.f32 %v817, %v832
      %v841 = vmul.f32 %v818, %v836
      %v842 = vmul.f32 %v819, %v834
      %v846 = vrot.slane %v840, 6
      %v847 = vrot.slane %v841, 6
      %v848 = vrot.slane %v842, 6
      %849 = vrot.lane.b32.xlu0 %v846, 109
      %v850 = vpop.permute.xlu0 %849
      %851 = vrot.lane.b32.xlu0 %v847, 109
      %v852 = vpop.permute.xlu0 %851
      %853 = vrot.lane.b32.xlu0 %v848, 109
      %v854 = vpop.permute.xlu0 %853
      %vm855 = vcmask 891904
      %v856 = vsel %vm855, %v850, %v852
      %v857 = vsel %vm855, %v852, %v854
      %860 = vst [vmem:[#allocation3 + $0x20] sm:$0xc0] %v856
      %861 = vst [vmem:[#allocation3 + $0x28] sm:$0xc0] %v857
      %v862 = vld [vmem:[#allocation2] sm:$0x30]
      %v863 = vld [vmem:[#allocation2 + $0x8] sm:$0x30]
      %v864 = vld [vmem:[#allocation2 + $0x10] sm:$0x30]
      %s865 = scalar_lea.vmem %s5, 19
      %v866 = vld [vmem:[%s865] ss:$8 sm:$0x3]
      %v868 = vlaneseq
      %v869 = vshrl.u32 %v868, 7
      %v870 = vsub.s32 0, %v869
      %v871 = vrot.slane %v866, %v870
      %v872 = vlaneseq
      %v873 = vshrl.u32 %v872, 7
      %v874 = vsub.s32 1, %v873
      %v875 = vrot.slane %v866, %v874
      %876 = vrot.lane.b32.xlu0 %v871, 21
      %v877 = vpop.permute.xlu0 %876
      %878 = vrot.lane.b32.xlu0 %v875, 21
      %v879 = vpop.permute.xlu0 %878
      %vm880 = vcmask 171008
      %v881 = vsel %vm880, %v877, %v879
      %v885 = vmul.f32 %v862, %v877
      %v886 = vmul.f32 %v863, %v881
      %v887 = vmul.f32 %v864, %v879
      %v891 = vrot.slane %v885, 4
      %v892 = vrot.slane %v886, 4
      %v893 = vrot.slane %v887, 4
      %894 = vrot.lane.b32.xlu0 %v891, 107
      %v895 = vpop.permute.xlu0 %894
      %896 = vrot.lane.b32.xlu0 %v892, 107
      %v897 = vpop.permute.xlu0 %896
      %898 = vrot.lane.b32.xlu0 %v893, 107
      %v899 = vpop.permute.xlu0 %898
      %vm900 = vcmask 875520
      %v901 = vsel %vm900, %v895, %v897
      %v902 = vsel %vm900, %v897, %v899
      %905 = vst [vmem:[#allocation3 + $0x30] sm:$0x3] %v901
      %906 = vst [vmem:[#allocation3 + $0x38] sm:$0x3] %v902
      %v907 = vld [vmem:[#allocation2] sm:$0x30]
      %v908 = vld [vmem:[#allocation2 + $0x8] sm:$0x30]
      %v909 = vld [vmem:[#allocation2 + $0x10] sm:$0x30]
      %s910 = scalar_lea.vmem %s5, 20
      %v911 = vld [vmem:[%s910] ss:$8 sm:$0x3]
      %v913 = vlaneseq
      %v914 = vshrl.u32 %v913, 7
      %v915 = vsub.s32 0, %v914
      %v916 = vrot.slane %v911, %v915
      %v917 = vlaneseq
      %v918 = vshrl.u32 %v917, 7
      %v919 = vsub.s32 1, %v918
      %v920 = vrot.slane %v911, %v919
      %921 = vrot.lane.b32.xlu0 %v916, 49
      %v922 = vpop.permute.xlu0 %921
      %923 = vrot.lane.b32.xlu0 %v920, 49
      %v924 = vpop.permute.xlu0 %923
      %vm925 = vcmask 400384
      %v926 = vsel %vm925, %v922, %v924
      %v930 = vmul.f32 %v907, %v922
      %v931 = vmul.f32 %v908, %v926
      %v932 = vmul.f32 %v909, %v924
      %v936 = vrot.slane %v930, 2
      %v937 = vrot.slane %v931, 2
      %v938 = vrot.slane %v932, 2
      %939 = vrot.lane.b32.xlu0 %v936, 79
      %v940 = vpop.permute.xlu0 %939
      %941 = vrot.lane.b32.xlu0 %v937, 79
      %v942 = vpop.permute.xlu0 %941
      %943 = vrot.lane.b32.xlu0 %v938, 79
      %v944 = vpop.permute.xlu0 %943
      %vm945 = vcmask 646144
      %v946 = vsel %vm945, %v940, %v942
      %v947 = vsel %vm945, %v942, %v944
      %950 = vst [vmem:[#allocation3 + $0x30] sm:$0xc] %v946
      %951 = vst [vmem:[#allocation3 + $0x38] sm:$0xc] %v947
      %v952 = vld [vmem:[#allocation2] sm:$0x30]
      %v953 = vld [vmem:[#allocation2 + $0x8] sm:$0x30]
      %v954 = vld [vmem:[#allocation2 + $0x10] sm:$0x30]
      %s955 = scalar_lea.vmem %s5, 21
      %v956 = vld [vmem:[%s955] ss:$8 sm:$0x3]
      %v958 = vlaneseq
      %v959 = vshrl.u32 %v958, 7
      %v960 = vsub.s32 0, %v959
      %v961 = vrot.slane %v956, %v960
      %v962 = vlaneseq
      %v963 = vshrl.u32 %v962, 7
      %v964 = vsub.s32 1, %v963
      %v965 = vrot.slane %v956, %v964
      %966 = vrot.lane.b32.xlu0 %v961, 51
      %v967 = vpop.permute.xlu0 %966
      %968 = vrot.lane.b32.xlu0 %v965, 51
      %v969 = vpop.permute.xlu0 %968
      %v970 = vsel %vm354, %v967, %v969
      %v974 = vmul.f32 %v952, %v967
      %v975 = vmul.f32 %v953, %v970
      %v976 = vmul.f32 %v954, %v969
      %980 = vrot.lane.b32.xlu0 %v974, 77
      %v981 = vpop.permute.xlu0 %980
      %982 = vrot.lane.b32.xlu0 %v975, 77
      %v983 = vpop.permute.xlu0 %982
      %984 = vrot.lane.b32.xlu0 %v976, 77
      %v985 = vpop.permute.xlu0 %984
      %v986 = vsel %vm375, %v981, %v983
      %v987 = vsel %vm375, %v983, %v985
      %990 = vst [vmem:[#allocation3 + $0x30] sm:$0x30] %v986
      %991 = vst [vmem:[#allocation3 + $0x38] sm:$0x30] %v987
      %v992 = vld [vmem:[#allocation2] sm:$0x30]
      %v993 = vld [vmem:[#allocation2 + $0x8] sm:$0x30]
      %v994 = vld [vmem:[#allocation2 + $0x10] sm:$0x30]
      %s995 = scalar_lea.vmem %s5, 22
      %v996 = vld [vmem:[%s995] ss:$8 sm:$0x3]
      %v998 = vlaneseq
      %v999 = vshrl.u32 %v998, 7
      %v1000 = vsub.s32 0, %v999
      %v1001 = vrot.slane %v996, %v1000
      %v1002 = vlaneseq
      %v1003 = vshrl.u32 %v1002, 7
      %v1004 = vsub.s32 1, %v1003
      %v1005 = vrot.slane %v996, %v1004
      %1006 = vrot.lane.b32.xlu0 %v1001, 53
      %v1007 = vpop.permute.xlu0 %1006
      %1008 = vrot.lane.b32.xlu0 %v1005, 53
      %v1009 = vpop.permute.xlu0 %1008
      %vm1010 = vcmask 433152
      %v1011 = vsel %vm1010, %v1007, %v1009
      %v1015 = vmul.f32 %v992, %v1007
      %v1016 = vmul.f32 %v993, %v1011
      %v1017 = vmul.f32 %v994, %v1009
      %v1021 = vrot.slane %v1015, 6
      %v1022 = vrot.slane %v1016, 6
      %v1023 = vrot.slane %v1017, 6
      %1024 = vrot.lane.b32.xlu0 %v1021, 75
      %v1025 = vpop.permute.xlu0 %1024
      %1026 = vrot.lane.b32.xlu0 %v1022, 75
      %v1027 = vpop.permute.xlu0 %1026
      %1028 = vrot.lane.b32.xlu0 %v1023, 75
      %v1029 = vpop.permute.xlu0 %1028
      %vm1030 = vcmask 613376
      %v1031 = vsel %vm1030, %v1025, %v1027
      %v1032 = vsel %vm1030, %v1027, %v1029
      %1035 = vst [vmem:[#allocation3 + $0x30] sm:$0xc0] %v1031
      %1036 = vst [vmem:[#allocation3 + $0x38] sm:$0xc0] %v1032
      %v1037 = vld [vmem:[#allocation2] sm:$0x30]
      %v1038 = vld [vmem:[#allocation2 + $0x8] sm:$0x30]
      %v1039 = vld [vmem:[#allocation2 + $0x10] sm:$0x30]
      %s1040 = scalar_lea.vmem %s5, 23
      %v1041 = vld [vmem:[%s1040] ss:$8 sm:$0x3]
      %v1043 = vlaneseq
      %v1044 = vshrl.u32 %v1043, 7
      %v1045 = vsub.s32 0, %v1044
      %v1046 = vrot.slane %v1041, %v1045
      %v1047 = vlaneseq
      %v1048 = vshrl.u32 %v1047, 7
      %v1049 = vsub.s32 1, %v1048
      %v1050 = vrot.slane %v1041, %v1049
      %1051 = vrot.lane.b32.xlu0 %v1046, 81
      %v1052 = vpop.permute.xlu0 %1051
      %1053 = vrot.lane.b32.xlu0 %v1050, 81
      %v1054 = vpop.permute.xlu0 %1053
      %vm1055 = vcmask 662528
      %v1056 = vsel %vm1055, %v1052, %v1054
      %v1060 = vmul.f32 %v1037, %v1052
      %v1061 = vmul.f32 %v1038, %v1056
      %v1062 = vmul.f32 %v1039, %v1054
      %v1066 = vrot.slane %v1060, 4
      %v1067 = vrot.slane %v1061, 4
      %v1068 = vrot.slane %v1062, 4
      %1069 = vrot.lane.b32.xlu0 %v1066, 47
      %v1070 = vpop.permute.xlu0 %1069
      %1071 = vrot.lane.b32.xlu0 %v1067, 47
      %v1072 = vpop.permute.xlu0 %1071
      %1073 = vrot.lane.b32.xlu0 %v1068, 47
      %v1074 = vpop.permute.xlu0 %1073
      %vm1075 = vcmask 384000
      %v1076 = vsel %vm1075, %v1070, %v1072
      %v1077 = vsel %vm1075, %v1072, %v1074
      %1080 = vst [vmem:[#allocation3 + $0x40] sm:$0x3] %v1076
      %1081 = vst [vmem:[#allocation3 + $0x48] sm:$0x3] %v1077
      %v1082 = vld [vmem:[#allocation2] sm:$0x30]
      %v1083 = vld [vmem:[#allocation2 + $0x8] sm:$0x30]
      %v1084 = vld [vmem:[#allocation2 + $0x10] sm:$0x30]
      %s1085 = scalar_lea.vmem %s5, 32
      %v1086 = vld [vmem:[%s1085] ss:$8 sm:$0x3]
      %v1088 = vlaneseq
      %v1089 = vshrl.u32 %v1088, 7
      %v1090 = vsub.s32 0, %v1089
      %v1091 = vrot.slane %v1086, %v1090
      %v1092 = vlaneseq
      %v1093 = vshrl.u32 %v1092, 7
      %v1094 = vsub.s32 1, %v1093
      %v1095 = vrot.slane %v1086, %v1094
      %1096 = vrot.lane.b32.xlu0 %v1091, 83
      %v1097 = vpop.permute.xlu0 %1096
      %1098 = vrot.lane.b32.xlu0 %v1095, 83
      %v1099 = vpop.permute.xlu0 %1098
      %vm1100 = vcmask 678912
      %v1101 = vsel %vm1100, %v1097, %v1099
      %v1105 = vmul.f32 %v1082, %v1097
      %v1106 = vmul.f32 %v1083, %v1101
      %v1107 = vmul.f32 %v1084, %v1099
      %v1111 = vrot.slane %v1105, 2
      %v1112 = vrot.slane %v1106, 2
      %v1113 = vrot.slane %v1107, 2
      %1114 = vrot.lane.b32.xlu0 %v1111, 45
      %v1115 = vpop.permute.xlu0 %1114
      %1116 = vrot.lane.b32.xlu0 %v1112, 45
      %v1117 = vpop.permute.xlu0 %1116
      %1118 = vrot.lane.b32.xlu0 %v1113, 45
      %v1119 = vpop.permute.xlu0 %1118
      %vm1120 = vcmask 367616
      %v1121 = vsel %vm1120, %v1115, %v1117
      %v1122 = vsel %vm1120, %v1117, %v1119
      %1125 = vst [vmem:[#allocation3 + $0x40] sm:$0xc] %v1121
      %1126 = vst [vmem:[#allocation3 + $0x48] sm:$0xc] %v1122
      %v1127 = vld [vmem:[#allocation2] sm:$0x30]
      %v1128 = vld [vmem:[#allocation2 + $0x8] sm:$0x30]
      %v1129 = vld [vmem:[#allocation2 + $0x10] sm:$0x30]
      %s1130 = scalar_lea.vmem %s5, 33
      %v1131 = vld [vmem:[%s1130] ss:$8 sm:$0x3]
      %v1133 = vlaneseq
      %v1134 = vshrl.u32 %v1133, 7
      %v1135 = vsub.s32 0, %v1134
      %v1136 = vrot.slane %v1131, %v1135
      %v1137 = vlaneseq
      %v1138 = vshrl.u32 %v1137, 7
      %v1139 = vsub.s32 1, %v1138
      %v1140 = vrot.slane %v1131, %v1139
      %1141 = vrot.lane.b32.xlu0 %v1136, 85
      %v1142 = vpop.permute.xlu0 %1141
      %1143 = vrot.lane.b32.xlu0 %v1140, 85
      %v1144 = vpop.permute.xlu0 %1143
      %vm1145 = vcmask 695296
      %v1146 = vsel %vm1145, %v1142, %v1144
      %v1150 = vmul.f32 %v1127, %v1142
      %v1151 = vmul.f32 %v1128, %v1146
      %v1152 = vmul.f32 %v1129, %v1144
      %1156 = vrot.lane.b32.xlu0 %v1150, 43
      %v1157 = vpop.permute.xlu0 %1156
      %1158 = vrot.lane.b32.xlu0 %v1151, 43
      %v1159 = vpop.permute.xlu0 %1158
      %1160 = vrot.lane.b32.xlu0 %v1152, 43
      %v1161 = vpop.permute.xlu0 %1160
      %vm1162 = vcmask 351232
      %v1163 = vsel %vm1162, %v1157, %v1159
      %v1164 = vsel %vm1162, %v1159, %v1161
      %1167 = vst [vmem:[#allocation3 + $0x40] sm:$0x30] %v1163
      %1168 = vst [vmem:[#allocation3 + $0x48] sm:$0x30] %v1164
      %v1169 = vld [vmem:[#allocation2] sm:$0xc0]
      %v1170 = vld [vmem:[#allocation2 + $0x8] sm:$0xc0]
      %s1171 = scalar_lea.vmem %s5, 34
      %v1172 = vld [vmem:[%s1171] ss:$8 sm:$0x3]
      %v1174 = vlaneseq
      %v1175 = vshrl.u32 %v1174, 7
      %v1176 = vsub.s32 0, %v1175
      %v1177 = vrot.slane %v1172, %v1176
      %v1178 = vlaneseq
      %v1179 = vshrl.u32 %v1178, 7
      %v1180 = vsub.s32 1, %v1179
      %v1181 = vrot.slane %v1172, %v1180
      %v1184 = vmul.f32 %v1169, %v1177
      %v1185 = vmul.f32 %v1170, %v1181
      %1186 = vst [vmem:[#allocation3 + $0x40] sm:$0xc0] %v1184
      %1187 = vst [vmem:[#allocation3 + $0x48] sm:$0xc0] %v1185
      %v1188 = vld [vmem:[#allocation2] sm:$0xc0]
      %v1189 = vld [vmem:[#allocation2 + $0x8] sm:$0xc0]
      %v1190 = vld [vmem:[#allocation2 + $0x10] sm:$0xc0]
      %s1191 = scalar_lea.vmem %s5, 35
      %v1192 = vld [vmem:[%s1191] ss:$8 sm:$0x3]
      %v1194 = vlaneseq
      %v1195 = vshrl.u32 %v1194, 7
      %v1196 = vsub.s32 0, %v1195
      %v1197 = vrot.slane %v1192, %v1196
      %v1198 = vlaneseq
      %v1199 = vshrl.u32 %v1198, 7
      %v1200 = vsub.s32 1, %v1199
      %v1201 = vrot.slane %v1192, %v1200
      %1202 = vrot.lane.b32.xlu0 %v1197, 3
      %v1203 = vpop.permute.xlu0 %1202
      %1204 = vrot.lane.b32.xlu0 %v1201, 3
      %v1205 = vpop.permute.xlu0 %1204
      %vm1206 = vcmask 23552
      %v1207 = vsel %vm1206, %v1203, %v1205
      %v1211 = vmul.f32 %v1188, %v1203
      %v1212 = vmul.f32 %v1189, %v1207
      %v1213 = vmul.f32 %v1190, %v1205
      %v1217 = vrot.slane %v1211, 6
      %v1218 = vrot.slane %v1212, 6
      %v1219 = vrot.slane %v1213, 6
      %1220 = vrot.lane.b32.xlu0 %v1217, 125
      %v1221 = vpop.permute.xlu0 %1220
      %1222 = vrot.lane.b32.xlu0 %v1218, 125
      %v1223 = vpop.permute.xlu0 %1222
      %1224 = vrot.lane.b32.xlu0 %v1219, 125
      %v1225 = vpop.permute.xlu0 %1224
      %vm1226 = vcmask 1022976
      %v1227 = vsel %vm1226, %v1221, %v1223
      %v1228 = vsel %vm1226, %v1223, %v1225
      %1231 = vst [vmem:[#allocation3 + $0x50] sm:$0x3] %v1227
      %1232 = vst [vmem:[#allocation3 + $0x58] sm:$0x3] %v1228
      %v1233 = vld [vmem:[#allocation2] sm:$0xc0]
      %v1234 = vld [vmem:[#allocation2 + $0x8] sm:$0xc0]
      %v1235 = vld [vmem:[#allocation2 + $0x10] sm:$0xc0]
      %s1236 = scalar_lea.vmem %s5, 36
      %v1237 = vld [vmem:[%s1236] ss:$8 sm:$0x3]
      %v1239 = vlaneseq
      %v1240 = vshrl.u32 %v1239, 7
      %v1241 = vsub.s32 0, %v1240
      %v1242 = vrot.slane %v1237, %v1241
      %v1243 = vlaneseq
      %v1244 = vshrl.u32 %v1243, 7
      %v1245 = vsub.s32 1, %v1244
      %v1246 = vrot.slane %v1237, %v1245
      %1247 = vrot.lane.b32.xlu0 %v1242, 6
      %v1248 = vpop.permute.xlu0 %1247
      %1249 = vrot.lane.b32.xlu0 %v1246, 6
      %v1250 = vpop.permute.xlu0 %1249
      %vm1251 = vcmask 48128
      %v1252 = vsel %vm1251, %v1248, %v1250
      %v1256 = vmul.f32 %v1233, %v1248
      %v1257 = vmul.f32 %v1234, %v1252
      %v1258 = vmul.f32 %v1235, %v1250
      %v1262 = vrot.slane %v1256, 4
      %v1263 = vrot.slane %v1257, 4
      %v1264 = vrot.slane %v1258, 4
      %1265 = vrot.lane.b32.xlu0 %v1262, 122
      %v1266 = vpop.permute.xlu0 %1265
      %1267 = vrot.lane.b32.xlu0 %v1263, 122
      %v1268 = vpop.permute.xlu0 %1267
      %1269 = vrot.lane.b32.xlu0 %v1264, 122
      %v1270 = vpop.permute.xlu0 %1269
      %vm1271 = vcmask 998400
      %v1272 = vsel %vm1271, %v1266, %v1268
      %v1273 = vsel %vm1271, %v1268, %v1270
      %1276 = vst [vmem:[#allocation3 + $0x50] sm:$0xc] %v1272
      %1277 = vst [vmem:[#allocation3 + $0x58] sm:$0xc] %v1273
      %v1278 = vld [vmem:[#allocation2] sm:$0xc0]
      %v1279 = vld [vmem:[#allocation2 + $0x8] sm:$0xc0]
      %v1280 = vld [vmem:[#allocation2 + $0x10] sm:$0xc0]
      %s1281 = scalar_lea.vmem %s5, 37
      %v1282 = vld [vmem:[%s1281] ss:$8 sm:$0x3]
      %v1284 = vlaneseq
      %v1285 = vshrl.u32 %v1284, 7
      %v1286 = vsub.s32 0, %v1285
      %v1287 = vrot.slane %v1282, %v1286
      %v1288 = vlaneseq
      %v1289 = vshrl.u32 %v1288, 7
      %v1290 = vsub.s32 1, %v1289
      %v1291 = vrot.slane %v1282, %v1290
      %1292 = vrot.lane.b32.xlu0 %v1287, 48
      %v1293 = vpop.permute.xlu0 %1292
      %1294 = vrot.lane.b32.xlu0 %v1291, 48
      %v1295 = vpop.permute.xlu0 %1294
      %vm1296 = vcmask 392192
      %v1297 = vsel %vm1296, %v1293, %v1295
      %v1301 = vmul.f32 %v1278, %v1293
      %v1302 = vmul.f32 %v1279, %v1297
      %v1303 = vmul.f32 %v1280, %v1295
      %v1307 = vrot.slane %v1301, 2
      %v1308 = vrot.slane %v1302, 2
      %v1309 = vrot.slane %v1303, 2
      %1310 = vrot.lane.b32.xlu0 %v1307, 80
      %v1311 = vpop.permute.xlu0 %1310
      %1312 = vrot.lane.b32.xlu0 %v1308, 80
      %v1313 = vpop.permute.xlu0 %1312
      %1314 = vrot.lane.b32.xlu0 %v1309, 80
      %v1315 = vpop.permute.xlu0 %1314
      %vm1316 = vcmask 654336
      %v1317 = vsel %vm1316, %v1311, %v1313
      %v1318 = vsel %vm1316, %v1313, %v1315
      %1321 = vst [vmem:[#allocation3 + $0x50] sm:$0x30] %v1317
      %1322 = vst [vmem:[#allocation3 + $0x58] sm:$0x30] %v1318
      %v1323 = vld [vmem:[#allocation2] sm:$0xc0]
      %v1324 = vld [vmem:[#allocation2 + $0x8] sm:$0xc0]
      %v1325 = vld [vmem:[#allocation2 + $0x10] sm:$0xc0]
      %s1326 = scalar_lea.vmem %s5, 38
      %v1327 = vld [vmem:[%s1326] ss:$8 sm:$0x3]
      %v1329 = vlaneseq
      %v1330 = vshrl.u32 %v1329, 7
      %v1331 = vsub.s32 0, %v1330
      %v1332 = vrot.slane %v1327, %v1331
      %v1333 = vlaneseq
      %v1334 = vshrl.u32 %v1333, 7
      %v1335 = vsub.s32 1, %v1334
      %v1336 = vrot.slane %v1327, %v1335
      %1337 = vrot.lane.b32.xlu0 %v1332, 51
      %v1338 = vpop.permute.xlu0 %1337
      %1339 = vrot.lane.b32.xlu0 %v1336, 51
      %v1340 = vpop.permute.xlu0 %1339
      %v1341 = vsel %vm354, %v1338, %v1340
      %v1345 = vmul.f32 %v1323, %v1338
      %v1346 = vmul.f32 %v1324, %v1341
      %v1347 = vmul.f32 %v1325, %v1340
      %1351 = vrot.lane.b32.xlu0 %v1345, 77
      %v1352 = vpop.permute.xlu0 %1351
      %1353 = vrot.lane.b32.xlu0 %v1346, 77
      %v1354 = vpop.permute.xlu0 %1353
      %1355 = vrot.lane.b32.xlu0 %v1347, 77
      %v1356 = vpop.permute.xlu0 %1355
      %v1357 = vsel %vm375, %v1352, %v1354
      %v1358 = vsel %vm375, %v1354, %v1356
      %1361 = vst [vmem:[#allocation3 + $0x50] sm:$0xc0] %v1357
      %1362 = vst [vmem:[#allocation3 + $0x58] sm:$0xc0] %v1358
      %v1363 = vld [vmem:[#allocation2] sm:$0xc0]
      %v1364 = vld [vmem:[#allocation2 + $0x8] sm:$0xc0]
      %v1365 = vld [vmem:[#allocation2 + $0x10] sm:$0xc0]
      %s1366 = scalar_lea.vmem %s5, 39
      %v1367 = vld [vmem:[%s1366] ss:$8 sm:$0x3]
      %v1369 = vlaneseq
      %v1370 = vshrl.u32 %v1369, 7
      %v1371 = vsub.s32 0, %v1370
      %v1372 = vrot.slane %v1367, %v1371
      %v1373 = vlaneseq
      %v1374 = vshrl.u32 %v1373, 7
      %v1375 = vsub.s32 1, %v1374
      %v1376 = vrot.slane %v1367, %v1375
      %1377 = vrot.lane.b32.xlu0 %v1372, 54
      %v1378 = vpop.permute.xlu0 %1377
      %1379 = vrot.lane.b32.xlu0 %v1376, 54
      %v1380 = vpop.permute.xlu0 %1379
      %vm1381 = vcmask 441344
      %v1382 = vsel %vm1381, %v1378, %v1380
      %v1386 = vmul.f32 %v1363, %v1378
      %v1387 = vmul.f32 %v1364, %v1382
      %v1388 = vmul.f32 %v1365, %v1380
      %v1392 = vrot.slane %v1386, 6
      %v1393 = vrot.slane %v1387, 6
      %v1394 = vrot.slane %v1388, 6
      %1395 = vrot.lane.b32.xlu0 %v1392, 74
      %v1396 = vpop.permute.xlu0 %1395
      %1397 = vrot.lane.b32.xlu0 %v1393, 74
      %v1398 = vpop.permute.xlu0 %1397
      %1399 = vrot.lane.b32.xlu0 %v1394, 74
      %v1400 = vpop.permute.xlu0 %1399
      %vm1401 = vcmask 605184
      %v1402 = vsel %vm1401, %v1396, %v1398
      %v1403 = vsel %vm1401, %v1398, %v1400
      %1406 = vst [vmem:[#allocation3 + $0x60] sm:$0x3] %v1402
      %1407 = vst [vmem:[#allocation3 + $0x68] sm:$0x3] %v1403
      %v1408 = vld [vmem:[#allocation2] sm:$0xc0]
      %v1409 = vld [vmem:[#allocation2 + $0x8] sm:$0xc0]
      %v1410 = vld [vmem:[#allocation2 + $0x10] sm:$0xc0]
      %s1411 = scalar_lea.vmem %s5, 48
      %v1412 = vld [vmem:[%s1411] ss:$8 sm:$0x3]
      %v1414 = vlaneseq
      %v1415 = vshrl.u32 %v1414, 7
      %v1416 = vsub.s32 0, %v1415
      %v1417 = vrot.slane %v1412, %v1416
      %v1418 = vlaneseq
      %v1419 = vshrl.u32 %v1418, 7
      %v1420 = vsub.s32 1, %v1419
      %v1421 = vrot.slane %v1412, %v1420
      %1422 = vrot.lane.b32.xlu0 %v1417, 96
      %v1423 = vpop.permute.xlu0 %1422
      %1424 = vrot.lane.b32.xlu0 %v1421, 96
      %v1425 = vpop.permute.xlu0 %1424
      %vm1426 = vcmask 785408
      %v1427 = vsel %vm1426, %v1423, %v1425
      %v1431 = vmul.f32 %v1408, %v1423
      %v1432 = vmul.f32 %v1409, %v1427
      %v1433 = vmul.f32 %v1410, %v1425
      %v1437 = vrot.slane %v1431, 4
      %v1438 = vrot.slane %v1432, 4
      %v1439 = vrot.slane %v1433, 4
      %1440 = vrot.lane.b32.xlu0 %v1437, 32
      %v1441 = vpop.permute.xlu0 %1440
      %1442 = vrot.lane.b32.xlu0 %v1438, 32
      %v1443 = vpop.permute.xlu0 %1442
      %1444 = vrot.lane.b32.xlu0 %v1439, 32
      %v1445 = vpop.permute.xlu0 %1444
      %vm1446 = vcmask 261120
      %v1447 = vsel %vm1446, %v1441, %v1443
      %v1448 = vsel %vm1446, %v1443, %v1445
      %1451 = vst [vmem:[#allocation3 + $0x60] sm:$0xc] %v1447
      %1452 = vst [vmem:[#allocation3 + $0x68] sm:$0xc] %v1448
      %v1453 = vld [vmem:[#allocation2] sm:$0xc0]
      %v1454 = vld [vmem:[#allocation2 + $0x8] sm:$0xc0]
      %v1455 = vld [vmem:[#allocation2 + $0x10] sm:$0xc0]
      %s1456 = scalar_lea.vmem %s5, 49
      %v1457 = vld [vmem:[%s1456] ss:$8 sm:$0x3]
      %v1459 = vlaneseq
      %v1460 = vshrl.u32 %v1459, 7
      %v1461 = vsub.s32 0, %v1460
      %v1462 = vrot.slane %v1457, %v1461
      %v1463 = vlaneseq
      %v1464 = vshrl.u32 %v1463, 7
      %v1465 = vsub.s32 1, %v1464
      %v1466 = vrot.slane %v1457, %v1465
      %1467 = vrot.lane.b32.xlu0 %v1462, 99
      %v1468 = vpop.permute.xlu0 %1467
      %1469 = vrot.lane.b32.xlu0 %v1466, 99
      %v1470 = vpop.permute.xlu0 %1469
      %vm1471 = vcmask 809984
      %v1472 = vsel %vm1471, %v1468, %v1470
      %v1476 = vmul.f32 %v1453, %v1468
      %v1477 = vmul.f32 %v1454, %v1472
      %v1478 = vmul.f32 %v1455, %v1470
      %v1482 = vrot.slane %v1476, 2
      %v1483 = vrot.slane %v1477, 2
      %v1484 = vrot.slane %v1478, 2
      %1485 = vrot.lane.b32.xlu0 %v1482, 29
      %v1486 = vpop.permute.xlu0 %1485
      %1487 = vrot.lane.b32.xlu0 %v1483, 29
      %v1488 = vpop.permute.xlu0 %1487
      %1489 = vrot.lane.b32.xlu0 %v1484, 29
      %v1490 = vpop.permute.xlu0 %1489
      %vm1491 = vcmask 236544
      %v1492 = vsel %vm1491, %v1486, %v1488
      %v1493 = vsel %vm1491, %v1488, %v1490
      %1496 = vst [vmem:[#allocation3 + $0x60] sm:$0x30] %v1492
      %1497 = vst [vmem:[#allocation3 + $0x68] sm:$0x30] %v1493
      %v1498 = vld [vmem:[#allocation2] sm:$0xc0]
      %v1499 = vld [vmem:[#allocation2 + $0x8] sm:$0xc0]
      %v1500 = vld [vmem:[#allocation2 + $0x10] sm:$0xc0]
      %s1501 = scalar_lea.vmem %s5, 50
      %v1502 = vld [vmem:[%s1501] ss:$8 sm:$0x3]
      %v1504 = vlaneseq
      %v1505 = vshrl.u32 %v1504, 7
      %v1506 = vsub.s32 0, %v1505
      %v1507 = vrot.slane %v1502, %v1506
      %v1508 = vlaneseq
      %v1509 = vshrl.u32 %v1508, 7
      %v1510 = vsub.s32 1, %v1509
      %v1511 = vrot.slane %v1502, %v1510
      %1512 = vrot.lane.b32.xlu0 %v1507, 102
      %v1513 = vpop.permute.xlu0 %1512
      %1514 = vrot.lane.b32.xlu0 %v1511, 102
      %v1515 = vpop.permute.xlu0 %1514
      %v1516 = vsel %vm346, %v1513, %v1515
      %v1520 = vmul.f32 %v1498, %v1513
      %v1521 = vmul.f32 %v1499, %v1516
      %v1522 = vmul.f32 %v1500, %v1515
      %1526 = vrot.lane.b32.xlu0 %v1520, 26
      %v1527 = vpop.permute.xlu0 %1526
      %1528 = vrot.lane.b32.xlu0 %v1521, 26
      %v1529 = vpop.permute.xlu0 %1528
      %1530 = vrot.lane.b32.xlu0 %v1522, 26
      %v1531 = vpop.permute.xlu0 %1530
      %vm1532 = vcmask 211968
      %v1533 = vsel %vm1532, %v1527, %v1529
      %v1534 = vsel %vm1532, %v1529, %v1531
      %1537 = vst [vmem:[#allocation3 + $0x60] sm:$0xc0] %v1533
      %1538 = vst [vmem:[#allocation3 + $0x68] sm:$0xc0] %v1534
      %v1539 = vld [vmem:[%s3] sm:$0xff]
      %v1540 = vld [vmem:[#allocation3] sm:$0xff]
      %v1541 = vld [vmem:[#allocation3 + $0x8] sm:$0xff]
      %v1542 = vld [vmem:[#allocation3 + $0x10] sm:$0xff]
      %v1543 = vld [vmem:[#allocation3 + $0x18] sm:$0xff]
      %v1544 = vld [vmem:[#allocation3 + $0x20] sm:$0xff]
      %v1545 = vld [vmem:[#allocation3 + $0x28] sm:$0xff]
      %v1546 = vld [vmem:[#allocation3 + $0x30] sm:$0xff]
      %v1547 = vld [vmem:[#allocation3 + $0x38] sm:$0xff]
      %v1548 = vld [vmem:[#allocation3 + $0x40] sm:$0xff]
      %v1549 = vld [vmem:[#allocation3 + $0x48] sm:$0xff]
      %v1550 = vld [vmem:[#allocation3 + $0x50] sm:$0xff]
      %v1551 = vld [vmem:[#allocation3 + $0x58] sm:$0xff]
      %v1552 = vld [vmem:[#allocation3 + $0x60] sm:$0xff]
      %v1553 = vld [vmem:[#allocation3 + $0x68] sm:$0xff]
      %v1554 = vld [vmem:[%s4] sm:$0xff]
      %1556 = vset.pattern.permute.xlu0 0
      %1557 = vperm.xlu0 %1556, %v1554
      %v1558 = vpop.permute.xlu0 %1557
      %vm1560 = vcmask 457728
      %v1562 = vsel %vm1560, %v1539, 0
      %1564 = vmatprep.subr.mxu0 0.0
      %1565 = vmatpush1.msra.mxu0 0.0
      %1566 = vmatprep.subr.mxu0 0.0
      %1567 = vmatpush1.msra.mxu0 0.0
      %1568 = vmatprep.subr.mxu0 0.0
      %1569 = vmatpush1.msra.mxu0 0.0
      %1570 = vmatprep.subr.mxu0 0.0
      %1571 = vmatpush1.msra.mxu0 0.0
      %1572 = vmatprep.subr.mxu0 0.0
      %1573 = vmatpush1.msra.mxu0 0.0
      %1574 = vmatprep.subr.mxu0 0.0
      %1575 = vmatpush1.msra.mxu0 0.0
      %1576 = vmatprep.subr.mxu0 0.0
      %1577 = vmatpush1.msra.mxu0 0.0
      %1578 = vmatprep.subr.mxu0 0.0
      %1579 = vmatpush1.msra.mxu0 0.0
      %1580 = vmatprep.subr.mxu0 0.0
      %1581 = vmatpush1.msra.mxu0 0.0
      %1582 = vmatprep.subr.mxu0 %v1553
      %1583 = vmatpush1.msra.mxu0 %v1552
      %1584 = vmatprep.subr.mxu0 %v1551
      %1585 = vmatpush1.msra.mxu0 %v1550
      %1586 = vmatprep.subr.mxu0 %v1549
      %1587 = vmatpush1.msra.mxu0 %v1548
      %1588 = vmatprep.subr.mxu0 %v1547
      %1589 = vmatpush1.msra.mxu0 %v1546
      %1590 = vmatprep.subr.mxu0 %v1545
      %1591 = vmatpush1.msra.mxu0 %v1544
      %1592 = vmatprep.subr.mxu0 %v1543
      %1593 = vmatpush1.msra.mxu0 %v1542
      %1594 = vmatprep.subr.mxu0 %v1541
      %1595 = vmatpush1.msra.mxu0 %v1540
      %1596 = vmatprep.subr.mxu0 0.0
      %1597 = vmatpush2.msra.mxu0 0.0
      %1598 = vmatprep.subr.mxu0 0.0
      %1599 = vmatpush2.msra.mxu0 0.0
      %1600 = vmatprep.subr.mxu0 0.0
      %1601 = vmatpush2.msra.mxu0 0.0
      %1602 = vmatprep.subr.mxu0 0.0
      %1603 = vmatpush2.msra.mxu0 0.0
      %1604 = vmatprep.subr.mxu0 0.0
      %1605 = vmatpush2.msra.mxu0 0.0
      %1606 = vmatprep.subr.mxu0 0.0
      %1607 = vmatpush2.msra.mxu0 0.0
      %1608 = vmatprep.subr.mxu0 0.0
      %1609 = vmatpush2.msra.mxu0 0.0
      %1610 = vmatprep.subr.mxu0 0.0
      %1611 = vmatpush2.msra.mxu0 0.0
      %1612 = vmatprep.subr.mxu0 0.0
      %1613 = vmatpush2.msra.mxu0 0.0
      %1614 = vmatprep.subr.mxu0 0.0
      %1615 = vmatpush2.msra.mxu0 0.0
      %1616 = vmatprep.subr.mxu0 0.0
      %1617 = vmatpush2.msra.mxu0 0.0
      %1618 = vmatprep.subr.mxu0 0.0
      %1619 = vmatpush2.msra.mxu0 0.0
      %1620 = vmatprep.subr.mxu0 0.0
      %1621 = vmatpush2.msra.mxu0 0.0
      %1622 = vmatprep.subr.mxu0 0.0
      %1623 = vmatpush2.msra.mxu0 0.0
      %1624 = vmatprep.subr.mxu0 0.0
      %1625 = vmatpush2.msra.mxu0 0.0
      %1626 = vmatprep.subr.mxu0 0.0
      %1627 = vmatpush2.msra.mxu0 0.0
      %1628 = vmatprep.mubr.f32.mxu0 0.0
      %1629 = vmatmul.mubr.f32.gmra.mxu0 %v1562
      %v1630 = vpop.f32.mrf.mxu0
      %v1631 = vadd.f32 %v1558, %v1630
      %v1632 = vpop.f32.mrf.mxu0
      %v1633 = vadd.f32 %v1558, %v1632
      %1634 = vdwg.mxu0
      %1635 = vst [vmem:[%s251] sm:$0xff] %v1631
      %1636 = vst [vmem:[%s251 + $0x8] sm:$0xff] %v1633
      %p1637 = scmp.lt.s32.totalorder %s17, 1
      %s1638 = scalar_select %p1637, %s17, 1
      %s1639 = smul.addr %s1638, 2
      %s1640 = smul.addr %s1639, 8
      %s1641 = scalar_lea.vmem %s6, %s1640
      // Predicated region
      $region45: #{dilated_inception_forward.1} parent=43 // pred_check
        %p1642 = pneg %p166
      $region46: #{dilated_inception_forward.1} parent=43 // pred_check_branch
        %1644 = sbr.rel (%p1642) target = $region48
      $region47: #{dilated_inception_forward.1} parent=43 // pred_region
        _
      $region48: #{dilated_inception_forward.1} parent=43 // pred_fallthru
        _
    $region44: #{dilated_inception_forward.1} parent=5 // pred_fallthru
      _
    %p1645 = scmp.le.s32.totalorder 2, %s12
    // Predicated region
    $region49: #{dilated_inception_forward.1} parent=5 // pred_check
      %p1646 = pneg %p1645
    $region50: #{dilated_inception_forward.1} parent=5 // pred_check_branch
      %1648 = sbr.rel (%p1646) target = $region52
    $region51: #{dilated_inception_forward.1} parent=5 // pred_region
      %s1649 = ssub.s32 %s12, 2
      // Predicated region
      $region53: #{dilated_inception_forward.1} parent=51 // pred_check
        %p1650 = pneg %p172
      $region54: #{dilated_inception_forward.1} parent=51 // pred_check_branch
        %1652 = sbr.rel (%p1650) target = $region56
      $region55: #{dilated_inception_forward.1} parent=51 // pred_region
        %p1653 = scmp.lt.s32.totalorder %s18, 1
        %s1654 = scalar_select %p1653, %s18, 1
        %s1655 = smul.addr %s1654, 2
        %s1656 = smul.addr %s1655, 8
        %s1657 = scalar_lea.vmem %s6, %s1656
      $region56: #{dilated_inception_forward.1} parent=51 // pred_fallthru
        _
    $region52: #{dilated_inception_forward.1} parent=5 // pred_fallthru
      _
  $region6: #{dilated_inception_forward.1} parent=0 // loop_footer
    %s16 = sadd.s32 1, %s12
  $region7: #{dilated_inception_forward.1} parent=0 // loop_footer_branch
    %11 = sbr.rel target = $region3
  $region8: #{dilated_inception_forward.1} parent=0 // loop_exit
    _

</llo_original>
